<compile_context>
chip_gen: v6e
topology: v6e:2x2x1
jax: 0.10.0
libtpu: 0.0.40
codegen_flags: <defaults>
</compile_context>

<pallas_src>
from functools import partial

import jax
import jax.numpy as jnp
from jax.experimental import pallas as pl
from jax.experimental.pallas import tpu as pltpu


# ----------------------------- Pallas kernels -------------------------------
def _gated_conv_kernel_split(x_ref, wx_ref, wg_ref, bx_ref, bg_ref, o_ref, *,
                             kh, kw, w_in, l_out):
    """Two-dot GLU path (used when Cout/2 is not a multiple of 8).

    x_ref : (1, Cin, L_in)         one image, rows flattened onto lanes
    wx_ref: (KH*KW, Cout/2, Cin)   per-tap "value" weights (VMEM resident)
    wg_ref: (KH*KW, Cout/2, Cin)   per-tap "gate"  weights (VMEM resident)
    bx_ref: (Cout/2, 1) f32        value bias
    bg_ref: (Cout/2, 1) f32        gate  bias
    o_ref : (1, Cout/2, L_out)     full-width output rows (OH * W)
    """
    x = x_ref[0]                                      # (Cin, L_in)
    half = wx_ref.shape[1]
    acc_x = jnp.zeros((half, l_out), jnp.float32)
    acc_g = jnp.zeros((half, l_out), jnp.float32)
    for t in range(kh * kw):                          # static, unrolled
        i, j = divmod(t, kw)
        off = i * w_in + j
        xs = x[:, off:off + l_out]                    # shifted lane slice (Cin, L_out)
        acc_x = acc_x + jnp.dot(wx_ref[t], xs, preferred_element_type=jnp.float32)
        acc_g = acc_g + jnp.dot(wg_ref[t], xs, preferred_element_type=jnp.float32)
    acc_x = acc_x + bx_ref[...]
    acc_g = acc_g + bg_ref[...]
    o_ref[0] = (acc_x * jax.nn.sigmoid(acc_g)).astype(o_ref.dtype)


def _gated_conv_kernel_fused(x_ref, w_ref, b_ref, o_ref, *, kh, kw, w_in,
                             l_out, half):
    """Single-dot GLU path: Cout/2 % 8 == 0 -> sublane-aligned split is free."""
    x = x_ref[0]                                      # (Cin, L_in)
    cout = w_ref.shape[1]
    acc = jnp.zeros((cout, l_out), jnp.float32)
    for t in range(kh * kw):
        i, j = divmod(t, kw)
        off = i * w_in + j
        xs = x[:, off:off + l_out]
        acc = acc + jnp.dot(w_ref[t], xs, preferred_element_type=jnp.float32)
    acc = acc + b_ref[...]
    o_ref[0] = (acc[:half] * jax.nn.sigmoid(acc[half:])).astype(o_ref.dtype)


# -------------------------------- wrapper ------------------------------------
@partial(jax.jit, static_argnames=("compute_dtype", "out_dtype"))
def gated_conv2d(x_nchw, v, g, bias, *, compute_dtype=jnp.bfloat16,
                 out_dtype=jnp.float32):
    """Forward pass of GatedConv2D (weight_norm Conv2d, VALID, stride 1 + GLU).

    x_nchw : (N, Cin, H, W)
    v      : (Cout, Cin, KH, KW)   weight_norm 'v'
    g      : (Cout, 1, 1, 1)       weight_norm 'g' (dim=0)
    bias   : (Cout,)
    returns: (N, Cout // 2, OH, OW) in out_dtype
    """
    n, cin, h, w_in = x_nchw.shape
    cout, _, kh, kw = v.shape
    assert cout % 2 == 0, "GLU requires an even number of output channels"
    half = cout // 2
    oh, ow = h - kh + 1, w_in - kw + 1
    l_out = oh * w_in                   # full-width output rows; cols >= OW are garbage
    l_in = h * w_in + (kw - 1)          # pad so the largest tap slice stays in-bounds

    # weight norm (dim=0): w[o] = g[o] * v[o] / ||v[o]||_2  (f32, like PyTorch;
    # no epsilon -> an all-zero filter row yields inf/NaN exactly as torch does).
    v32 = v.astype(jnp.float32)
    norm = jnp.sqrt(jnp.sum(v32 * v32, axis=(1, 2, 3), keepdims=True))
    w = g.astype(jnp.float32) * v32 / norm                       # (Cout, Cin, KH, KW)
    # per-tap layout (KH*KW, Cout, Cin): the kernel does one (Cout,Cin)@(Cin,L) per tap
    w_taps = (jnp.transpose(w, (2, 3, 0, 1))
              .reshape(kh * kw, cout, cin).astype(compute_dtype))

    # Raw input, flattened + tail-padded by KW-1 lanes.  This pads x itself
    # (fused with the bf16 cast by XLA) -- NOT a KH*KW-expanded patches array.
    x_flat = x_nchw.reshape(n, cin, h * w_in).astype(compute_dtype)
    x_flat = jnp.pad(x_flat, ((0, 0), (0, 0), (0, l_in - h * w_in)))

    bias32 = bias.astype(jnp.float32)

    itemsize = jnp.dtype(compute_dtype).itemsize
    out_itemsize = jnp.dtype(out_dtype).itemsize
    cost = pl.CostEstimate(
        flops=2 * n * l_out * (kh * kw * cin) * cout,
        transcendentals=n * half * l_out,
        bytes_accessed=(n * cin * l_in * itemsize          # x streamed exactly once
                        + kh * kw * cout * cin * itemsize  # weights
                        + cout * 4                         # bias
                        + n * half * l_out * out_itemsize))

    # Explicit VMEM budget: double-buffered x/out blocks + single-copy weights
    # + f32 accumulators.  Floor of 16 MiB is safe on every generation.
    vmem_budget = (2 * cin * l_in * itemsize
                   + kh * kw * cout * cin * itemsize
                   + cout * 4
                   + 2 * half * l_out * out_itemsize
                   + cout * l_out * 4)
    vmem_limit = int(min(100 * 1024 * 1024, max(16 * 1024 * 1024, 2 * vmem_budget)))

    # Whole-array VMEM residence = exactly one copy, never re-fetched and never
    # double-buffered (addresses the "single-buffer the resident operands" item).
    resident = pl.BlockSpec(memory_space=pltpu.MemorySpace.VMEM)
    x_spec = pl.BlockSpec((1, cin, l_in), lambda nb: (nb, 0, 0))
    o_spec = pl.BlockSpec((1, half, l_out), lambda nb: (nb, 0, 0))
    params = pltpu.CompilerParams(dimension_semantics=("parallel",),
                                  vmem_limit_bytes=vmem_limit)
    out_shape = jax.ShapeDtypeStruct((n, half, l_out), out_dtype)

    if half % 8 == 0:
        kernel = partial(_gated_conv_kernel_fused, kh=kh, kw=kw, w_in=w_in,
                         l_out=l_out, half=half)
        out = pl.pallas_call(
            kernel, out_shape=out_shape, grid=(n,),
            in_specs=[x_spec, resident, resident],
            out_specs=o_spec, compiler_params=params, cost_estimate=cost,
        )(x_flat, w_taps, bias32.reshape(cout, 1))
    else:
        kernel = partial(_gated_conv_kernel_split, kh=kh, kw=kw, w_in=w_in,
                         l_out=l_out)
        out = pl.pallas_call(
            kernel, out_shape=out_shape, grid=(n,),
            in_specs=[x_spec, resident, resident, resident, resident],
            out_specs=o_spec, compiler_params=params, cost_estimate=cost,
        )(x_flat, w_taps[:, :half], w_taps[:, half:],
          bias32[:half].reshape(half, 1), bias32[half:].reshape(half, 1))

    # TODO(synk): nn.Dropout(p=0.0) (and eval mode) is identity -> skipped.
    # Output is already channel-major NCHW -- no transpose.  Only the (W-OW)
    # garbage columns per row are sliced off; callers tolerant of the
    # row-padded (N, half, OH, W) layout can skip even this slice.
    out = out.reshape(n, half, oh, w_in)[:, :, :, :ow]
    return out


# ------------------------------- reference ----------------------------------
def _reference(x_nchw, v, g, bias, compute_dtype=jnp.float32):
    v32 = v.astype(jnp.float32)
    norm = jnp.sqrt(jnp.sum(v32 * v32, axis=(1, 2, 3), keepdims=True))
    w = (g.astype(jnp.float32) * v32 / norm).astype(compute_dtype)
    y = jax.lax.conv_general_dilated(
        x_nchw.astype(compute_dtype), w,
        window_strides=(1, 1), padding="VALID",
        dimension_numbers=("NCHW", "OIHW", "NCHW"),
        preferred_element_type=jnp.float32)
    y = y + bias.reshape(1, -1, 1, 1).astype(jnp.float32)
    half = y.shape[1] // 2
    return y[:, :half] * jax.nn.sigmoid(y[:, half:])


if __name__ == "__main__":
    # GatedConv2D(n_in_filters=4, n_out_filters=8, kernel_size=3, p_dropout=0.0)
    N, CIN, H, W = 2, 4, 16, 16
    KH = KW = 3
    key = jax.random.PRNGKey(0)

    # COUT=8  -> half=4  -> split-dot GLU path (toy config)
    # COUT=16 -> half=8  -> fused single-dot GLU path (sublane-aligned split)
    for COUT in (8, 16):
        kx, kv, kg, kb = jax.random.split(jax.random.fold_in(key, COUT), 4)
        x = jax.random.normal(kx, (N, CIN, H, W), dtype=jnp.float32)
        v = jax.random.normal(kv, (COUT, CIN, KH, KW), dtype=jnp.float32) * 0.2
        g = 1.0 + 0.1 * jax.random.normal(kg, (COUT, 1, 1, 1), dtype=jnp.float32)
        bias = 0.1 * jax.random.normal(kb, (COUT,), dtype=jnp.float32)

        # 1) exact-semantics path (f32 operands) vs. f32 conv reference
        out_f32 = jax.block_until_ready(
            gated_conv2d(x, v, g, bias, compute_dtype=jnp.float32))
        ref_f32 = jax.block_until_ready(_reference(x, v, g, bias, jnp.float32))
        assert out_f32.shape == (N, COUT // 2, H - KH + 1, W - KW + 1), out_f32.shape
        assert jnp.allclose(out_f32, ref_f32, atol=2e-4, rtol=2e-4), float(
            jnp.max(jnp.abs(out_f32 - ref_f32)))

        # 2) optimized path (bf16 MXU operands, f32 accumulate) vs. bf16 reference
        out_bf16 = jax.block_until_ready(gated_conv2d(x, v, g, bias))
        ref_bf16 = jax.block_until_ready(_reference(x, v, g, bias, jnp.bfloat16))
        assert jnp.allclose(out_bf16, ref_bf16, atol=2e-3, rtol=2e-2), float(
            jnp.max(jnp.abs(out_bf16 - ref_bf16)))

    print("KERNEL_OK")
</pallas_src>

<mosaic_0001>
module attributes {stable_mosaic.version = 11 : i64} {
  func.func @_gated_conv_kernel_split(%arg0: i32, %arg1: memref<1x4x258xf32, #tpu.memory_space<vmem>>, %arg2: memref<9x4x4xf32, #tpu.memory_space<vmem>>, %arg3: memref<9x4x4xf32, #tpu.memory_space<vmem>>, %arg4: memref<4x1xf32, #tpu.memory_space<vmem>>, %arg5: memref<4x1xf32, #tpu.memory_space<vmem>>, %arg6: memref<1x4x224xf32, #tpu.memory_space<vmem>>) attributes {dimension_semantics = [#tpu.dimension_semantics<parallel>], iteration_bounds = array<i64: 2>, scalar_prefetch = 0 : i64, scratch_operands = 0 : i64, tpu.core_type = #tpu.core_type<tc>, window_params = [{transform_indices = @transform_0, window_bounds = array<i64: 1, 4, 258>}, {pipeline_mode = #tpu.pipeline_mode<synchronous>, transform_indices = @transform_1, window_bounds = array<i64: 9, 4, 4>}, {pipeline_mode = #tpu.pipeline_mode<synchronous>, transform_indices = @transform_2, window_bounds = array<i64: 9, 4, 4>}, {pipeline_mode = #tpu.pipeline_mode<synchronous>, transform_indices = @transform_3, window_bounds = array<i64: 4, 1>}, {pipeline_mode = #tpu.pipeline_mode<synchronous>, transform_indices = @transform_4, window_bounds = array<i64: 4, 1>}, {transform_indices = @transform_5, window_bounds = array<i64: 1, 4, 224>}]} {
    %c0 = arith.constant 0 : index
    %c0_0 = arith.constant 0 : index
    %c0_1 = arith.constant 0 : index
    %0 = vector.load %arg1[%c0, %c0_0, %c0_1] : memref<1x4x258xf32, #tpu.memory_space<vmem>>, vector<1x4x258xf32>
    %1 = vector.shape_cast %0 : vector<1x4x258xf32> to vector<4x258xf32>
    %cst = arith.constant 0.000000e+00 : f32
    %2 = vector.broadcast %cst : f32 to vector<4x224xf32>
    %cst_2 = arith.constant 0.000000e+00 : f32
    %3 = vector.broadcast %cst_2 : f32 to vector<4x224xf32>
    %4 = vector.extract_strided_slice %1 {offsets = [0, 0], sizes = [4, 224], strides = [1, 1]} : vector<4x258xf32> to vector<4x224xf32>
    %c0_3 = arith.constant 0 : index
    %c0_4 = arith.constant 0 : index
    %c0_5 = arith.constant 0 : index
    %5 = vector.load %arg2[%c0_3, %c0_4, %c0_5] : memref<9x4x4xf32, #tpu.memory_space<vmem>>, vector<1x4x4xf32>
    %6 = vector.shape_cast %5 : vector<1x4x4xf32> to vector<4x4xf32>
    %cst_6 = arith.constant dense<0.000000e+00> : vector<4x224xf32>
    %7 = tpu.matmul %6, %4, %cst_6 {dimension_numbers = #tpu.dot_dimension_numbers<[1], [0], [0], [1], [0, 0, 1, 1], [], []>} : vector<4x4xf32>, vector<4x224xf32>, vector<4x224xf32> -> vector<4x224xf32>
    %8 = arith.addf %2, %7 : vector<4x224xf32>
    %c0_7 = arith.constant 0 : index
    %c0_8 = arith.constant 0 : index
    %c0_9 = arith.constant 0 : index
    %9 = vector.load %arg3[%c0_7, %c0_8, %c0_9] : memref<9x4x4xf32, #tpu.memory_space<vmem>>, vector<1x4x4xf32>
    %10 = vector.shape_cast %9 : vector<1x4x4xf32> to vector<4x4xf32>
    %cst_10 = arith.constant dense<0.000000e+00> : vector<4x224xf32>
    %11 = tpu.matmul %10, %4, %cst_10 {dimension_numbers = #tpu.dot_dimension_numbers<[1], [0], [0], [1], [0, 0, 1, 1], [], []>} : vector<4x4xf32>, vector<4x224xf32>, vector<4x224xf32> -> vector<4x224xf32>
    %12 = arith.addf %3, %11 : vector<4x224xf32>
    %13 = vector.extract_strided_slice %1 {offsets = [0, 1], sizes = [4, 224], strides = [1, 1]} : vector<4x258xf32> to vector<4x224xf32>
    %c1 = arith.constant 1 : index
    %c0_11 = arith.constant 0 : index
    %c0_12 = arith.constant 0 : index
    %14 = vector.load %arg2[%c1, %c0_11, %c0_12] : memref<9x4x4xf32, #tpu.memory_space<vmem>>, vector<1x4x4xf32>
    %15 = vector.shape_cast %14 : vector<1x4x4xf32> to vector<4x4xf32>
    %cst_13 = arith.constant dense<0.000000e+00> : vector<4x224xf32>
    %16 = tpu.matmul %15, %13, %cst_13 {dimension_numbers = #tpu.dot_dimension_numbers<[1], [0], [0], [1], [0, 0, 1, 1], [], []>} : vector<4x4xf32>, vector<4x224xf32>, vector<4x224xf32> -> vector<4x224xf32>
    %17 = arith.addf %8, %16 : vector<4x224xf32>
    %c1_14 = arith.constant 1 : index
    %c0_15 = arith.constant 0 : index
    %c0_16 = arith.constant 0 : index
    %18 = vector.load %arg3[%c1_14, %c0_15, %c0_16] : memref<9x4x4xf32, #tpu.memory_space<vmem>>, vector<1x4x4xf32>
    %19 = vector.shape_cast %18 : vector<1x4x4xf32> to vector<4x4xf32>
    %cst_17 = arith.constant dense<0.000000e+00> : vector<4x224xf32>
    %20 = tpu.matmul %19, %13, %cst_17 {dimension_numbers = #tpu.dot_dimension_numbers<[1], [0], [0], [1], [0, 0, 1, 1], [], []>} : vector<4x4xf32>, vector<4x224xf32>, vector<4x224xf32> -> vector<4x224xf32>
    %21 = arith.addf %12, %20 : vector<4x224xf32>
    %22 = vector.extract_strided_slice %1 {offsets = [0, 2], sizes = [4, 224], strides = [1, 1]} : vector<4x258xf32> to vector<4x224xf32>
    %c2 = arith.constant 2 : index
    %c0_18 = arith.constant 0 : index
    %c0_19 = arith.constant 0 : index
    %23 = vector.load %arg2[%c2, %c0_18, %c0_19] : memref<9x4x4xf32, #tpu.memory_space<vmem>>, vector<1x4x4xf32>
    %24 = vector.shape_cast %23 : vector<1x4x4xf32> to vector<4x4xf32>
    %cst_20 = arith.constant dense<0.000000e+00> : vector<4x224xf32>
    %25 = tpu.matmul %24, %22, %cst_20 {dimension_numbers = #tpu.dot_dimension_numbers<[1], [0], [0], [1], [0, 0, 1, 1], [], []>} : vector<4x4xf32>, vector<4x224xf32>, vector<4x224xf32> -> vector<4x224xf32>
    %26 = arith.addf %17, %25 : vector<4x224xf32>
    %c2_21 = arith.constant 2 : index
    %c0_22 = arith.constant 0 : index
    %c0_23 = arith.constant 0 : index
    %27 = vector.load %arg3[%c2_21, %c0_22, %c0_23] : memref<9x4x4xf32, #tpu.memory_space<vmem>>, vector<1x4x4xf32>
    %28 = vector.shape_cast %27 : vector<1x4x4xf32> to vector<4x4xf32>
    %cst_24 = arith.constant dense<0.000000e+00> : vector<4x224xf32>
    %29 = tpu.matmul %28, %22, %cst_24 {dimension_numbers = #tpu.dot_dimension_numbers<[1], [0], [0], [1], [0, 0, 1, 1], [], []>} : vector<4x4xf32>, vector<4x224xf32>, vector<4x224xf32> -> vector<4x224xf32>
    %30 = arith.addf %21, %29 : vector<4x224xf32>
    %31 = vector.extract_strided_slice %1 {offsets = [0, 16], sizes = [4, 224], strides = [1, 1]} : vector<4x258xf32> to vector<4x224xf32>
    %c3 = arith.constant 3 : index
    %c0_25 = arith.constant 0 : index
    %c0_26 = arith.constant 0 : index
    %32 = vector.load %arg2[%c3, %c0_25, %c0_26] : memref<9x4x4xf32, #tpu.memory_space<vmem>>, vector<1x4x4xf32>
    %33 = vector.shape_cast %32 : vector<1x4x4xf32> to vector<4x4xf32>
    %cst_27 = arith.constant dense<0.000000e+00> : vector<4x224xf32>
    %34 = tpu.matmul %33, %31, %cst_27 {dimension_numbers = #tpu.dot_dimension_numbers<[1], [0], [0], [1], [0, 0, 1, 1], [], []>} : vector<4x4xf32>, vector<4x224xf32>, vector<4x224xf32> -> vector<4x224xf32>
    %35 = arith.addf %26, %34 : vector<4x224xf32>
    %c3_28 = arith.constant 3 : index
    %c0_29 = arith.constant 0 : index
    %c0_30 = arith.constant 0 : index
    %36 = vector.load %arg3[%c3_28, %c0_29, %c0_30] : memref<9x4x4xf32, #tpu.memory_space<vmem>>, vector<1x4x4xf32>
    %37 = vector.shape_cast %36 : vector<1x4x4xf32> to vector<4x4xf32>
    %cst_31 = arith.constant dense<0.000000e+00> : vector<4x224xf32>
    %38 = tpu.matmul %37, %31, %cst_31 {dimension_numbers = #tpu.dot_dimension_numbers<[1], [0], [0], [1], [0, 0, 1, 1], [], []>} : vector<4x4xf32>, vector<4x224xf32>, vector<4x224xf32> -> vector<4x224xf32>
    %39 = arith.addf %30, %38 : vector<4x224xf32>
    %40 = vector.extract_strided_slice %1 {offsets = [0, 17], sizes = [4, 224], strides = [1, 1]} : vector<4x258xf32> to vector<4x224xf32>
    %c4 = arith.constant 4 : index
    %c0_32 = arith.constant 0 : index
    %c0_33 = arith.constant 0 : index
    %41 = vector.load %arg2[%c4, %c0_32, %c0_33] : memref<9x4x4xf32, #tpu.memory_space<vmem>>, vector<1x4x4xf32>
    %42 = vector.shape_cast %41 : vector<1x4x4xf32> to vector<4x4xf32>
    %cst_34 = arith.constant dense<0.000000e+00> : vector<4x224xf32>
    %43 = tpu.matmul %42, %40, %cst_34 {dimension_numbers = #tpu.dot_dimension_numbers<[1], [0], [0], [1], [0, 0, 1, 1], [], []>} : vector<4x4xf32>, vector<4x224xf32>, vector<4x224xf32> -> vector<4x224xf32>
    %44 = arith.addf %35, %43 : vector<4x224xf32>
    %c4_35 = arith.constant 4 : index
    %c0_36 = arith.constant 0 : index
    %c0_37 = arith.constant 0 : index
    %45 = vector.load %arg3[%c4_35, %c0_36, %c0_37] : memref<9x4x4xf32, #tpu.memory_space<vmem>>, vector<1x4x4xf32>
    %46 = vector.shape_cast %45 : vector<1x4x4xf32> to vector<4x4xf32>
    %cst_38 = arith.constant dense<0.000000e+00> : vector<4x224xf32>
    %47 = tpu.matmul %46, %40, %cst_38 {dimension_numbers = #tpu.dot_dimension_numbers<[1], [0], [0], [1], [0, 0, 1, 1], [], []>} : vector<4x4xf32>, vector<4x224xf32>, vector<4x224xf32> -> vector<4x224xf32>
    %48 = arith.addf %39, %47 : vector<4x224xf32>
    %49 = vector.extract_strided_slice %1 {offsets = [0, 18], sizes = [4, 224], strides = [1, 1]} : vector<4x258xf32> to vector<4x224xf32>
    %c5 = arith.constant 5 : index
    %c0_39 = arith.constant 0 : index
    %c0_40 = arith.constant 0 : index
    %50 = vector.load %arg2[%c5, %c0_39, %c0_40] : memref<9x4x4xf32, #tpu.memory_space<vmem>>, vector<1x4x4xf32>
    %51 = vector.shape_cast %50 : vector<1x4x4xf32> to vector<4x4xf32>
    %cst_41 = arith.constant dense<0.000000e+00> : vector<4x224xf32>
    %52 = tpu.matmul %51, %49, %cst_41 {dimension_numbers = #tpu.dot_dimension_numbers<[1], [0], [0], [1], [0, 0, 1, 1], [], []>} : vector<4x4xf32>, vector<4x224xf32>, vector<4x224xf32> -> vector<4x224xf32>
    %53 = arith.addf %44, %52 : vector<4x224xf32>
    %c5_42 = arith.constant 5 : index
    %c0_43 = arith.constant 0 : index
    %c0_44 = arith.constant 0 : index
    %54 = vector.load %arg3[%c5_42, %c0_43, %c0_44] : memref<9x4x4xf32, #tpu.memory_space<vmem>>, vector<1x4x4xf32>
    %55 = vector.shape_cast %54 : vector<1x4x4xf32> to vector<4x4xf32>
    %cst_45 = arith.constant dense<0.000000e+00> : vector<4x224xf32>
    %56 = tpu.matmul %55, %49, %cst_45 {dimension_numbers = #tpu.dot_dimension_numbers<[1], [0], [0], [1], [0, 0, 1, 1], [], []>} : vector<4x4xf32>, vector<4x224xf32>, vector<4x224xf32> -> vector<4x224xf32>
    %57 = arith.addf %48, %56 : vector<4x224xf32>
    %58 = vector.extract_strided_slice %1 {offsets = [0, 32], sizes = [4, 224], strides = [1, 1]} : vector<4x258xf32> to vector<4x224xf32>
    %c6 = arith.constant 6 : index
    %c0_46 = arith.constant 0 : index
    %c0_47 = arith.constant 0 : index
    %59 = vector.load %arg2[%c6, %c0_46, %c0_47] : memref<9x4x4xf32, #tpu.memory_space<vmem>>, vector<1x4x4xf32>
    %60 = vector.shape_cast %59 : vector<1x4x4xf32> to vector<4x4xf32>
    %cst_48 = arith.constant dense<0.000000e+00> : vector<4x224xf32>
    %61 = tpu.matmul %60, %58, %cst_48 {dimension_numbers = #tpu.dot_dimension_numbers<[1], [0], [0], [1], [0, 0, 1, 1], [], []>} : vector<4x4xf32>, vector<4x224xf32>, vector<4x224xf32> -> vector<4x224xf32>
    %62 = arith.addf %53, %61 : vector<4x224xf32>
    %c6_49 = arith.constant 6 : index
    %c0_50 = arith.constant 0 : index
    %c0_51 = arith.constant 0 : index
    %63 = vector.load %arg3[%c6_49, %c0_50, %c0_51] : memref<9x4x4xf32, #tpu.memory_space<vmem>>, vector<1x4x4xf32>
    %64 = vector.shape_cast %63 : vector<1x4x4xf32> to vector<4x4xf32>
    %cst_52 = arith.constant dense<0.000000e+00> : vector<4x224xf32>
    %65 = tpu.matmul %64, %58, %cst_52 {dimension_numbers = #tpu.dot_dimension_numbers<[1], [0], [0], [1], [0, 0, 1, 1], [], []>} : vector<4x4xf32>, vector<4x224xf32>, vector<4x224xf32> -> vector<4x224xf32>
    %66 = arith.addf %57, %65 : vector<4x224xf32>
    %67 = vector.extract_strided_slice %1 {offsets = [0, 33], sizes = [4, 224], strides = [1, 1]} : vector<4x258xf32> to vector<4x224xf32>
    %c7 = arith.constant 7 : index
    %c0_53 = arith.constant 0 : index
    %c0_54 = arith.constant 0 : index
    %68 = vector.load %arg2[%c7, %c0_53, %c0_54] : memref<9x4x4xf32, #tpu.memory_space<vmem>>, vector<1x4x4xf32>
    %69 = vector.shape_cast %68 : vector<1x4x4xf32> to vector<4x4xf32>
    %cst_55 = arith.constant dense<0.000000e+00> : vector<4x224xf32>
    %70 = tpu.matmul %69, %67, %cst_55 {dimension_numbers = #tpu.dot_dimension_numbers<[1], [0], [0], [1], [0, 0, 1, 1], [], []>} : vector<4x4xf32>, vector<4x224xf32>, vector<4x224xf32> -> vector<4x224xf32>
    %71 = arith.addf %62, %70 : vector<4x224xf32>
    %c7_56 = arith.constant 7 : index
    %c0_57 = arith.constant 0 : index
    %c0_58 = arith.constant 0 : index
    %72 = vector.load %arg3[%c7_56, %c0_57, %c0_58] : memref<9x4x4xf32, #tpu.memory_space<vmem>>, vector<1x4x4xf32>
    %73 = vector.shape_cast %72 : vector<1x4x4xf32> to vector<4x4xf32>
    %cst_59 = arith.constant dense<0.000000e+00> : vector<4x224xf32>
    %74 = tpu.matmul %73, %67, %cst_59 {dimension_numbers = #tpu.dot_dimension_numbers<[1], [0], [0], [1], [0, 0, 1, 1], [], []>} : vector<4x4xf32>, vector<4x224xf32>, vector<4x224xf32> -> vector<4x224xf32>
    %75 = arith.addf %66, %74 : vector<4x224xf32>
    %76 = vector.extract_strided_slice %1 {offsets = [0, 34], sizes = [4, 224], strides = [1, 1]} : vector<4x258xf32> to vector<4x224xf32>
    %c8 = arith.constant 8 : index
    %c0_60 = arith.constant 0 : index
    %c0_61 = arith.constant 0 : index
    %77 = vector.load %arg2[%c8, %c0_60, %c0_61] : memref<9x4x4xf32, #tpu.memory_space<vmem>>, vector<1x4x4xf32>
    %78 = vector.shape_cast %77 : vector<1x4x4xf32> to vector<4x4xf32>
    %cst_62 = arith.constant dense<0.000000e+00> : vector<4x224xf32>
    %79 = tpu.matmul %78, %76, %cst_62 {dimension_numbers = #tpu.dot_dimension_numbers<[1], [0], [0], [1], [0, 0, 1, 1], [], []>} : vector<4x4xf32>, vector<4x224xf32>, vector<4x224xf32> -> vector<4x224xf32>
    %80 = arith.addf %71, %79 : vector<4x224xf32>
    %c8_63 = arith.constant 8 : index
    %c0_64 = arith.constant 0 : index
    %c0_65 = arith.constant 0 : index
    %81 = vector.load %arg3[%c8_63, %c0_64, %c0_65] : memref<9x4x4xf32, #tpu.memory_space<vmem>>, vector<1x4x4xf32>
    %82 = vector.shape_cast %81 : vector<1x4x4xf32> to vector<4x4xf32>
    %cst_66 = arith.constant dense<0.000000e+00> : vector<4x224xf32>
    %83 = tpu.matmul %82, %76, %cst_66 {dimension_numbers = #tpu.dot_dimension_numbers<[1], [0], [0], [1], [0, 0, 1, 1], [], []>} : vector<4x4xf32>, vector<4x224xf32>, vector<4x224xf32> -> vector<4x224xf32>
    %84 = arith.addf %75, %83 : vector<4x224xf32>
    %c0_67 = arith.constant 0 : index
    %c0_68 = arith.constant 0 : index
    %85 = vector.load %arg4[%c0_67, %c0_68] : memref<4x1xf32, #tpu.memory_space<vmem>>, vector<4x1xf32>
    %86 = vector.broadcast %85 : vector<4x1xf32> to vector<4x224xf32>
    %87 = arith.addf %80, %86 : vector<4x224xf32>
    %c0_69 = arith.constant 0 : index
    %c0_70 = arith.constant 0 : index
    %88 = vector.load %arg5[%c0_69, %c0_70] : memref<4x1xf32, #tpu.memory_space<vmem>>, vector<4x1xf32>
    %89 = vector.broadcast %88 : vector<4x1xf32> to vector<4x224xf32>
    %90 = arith.addf %84, %89 : vector<4x224xf32>
    %91 = arith.negf %90 : vector<4x224xf32>
    %92 = math.exp %91 : vector<4x224xf32>
    %cst_71 = arith.constant 1.000000e+00 : f32
    %93 = vector.broadcast %cst_71 : f32 to vector<4x224xf32>
    %94 = arith.addf %93, %92 : vector<4x224xf32>
    %95 = arith.divf %93, %94 : vector<4x224xf32>
    %96 = arith.mulf %87, %95 : vector<4x224xf32>
    %c0_72 = arith.constant 0 : index
    %c0_73 = arith.constant 0 : index
    %c0_74 = arith.constant 0 : index
    %97 = vector.load %arg6[%c0_72, %c0_73, %c0_74] : memref<1x4x224xf32, #tpu.memory_space<vmem>>, vector<1x4x224xf32>
    %98 = vector.shape_cast %97 : vector<1x4x224xf32> to vector<4x224xf32>
    %99 = vector.shape_cast %96 : vector<4x224xf32> to vector<1x4x224xf32>
    tpu.vector_store %arg6[%c0_72, %c0_73, %c0_74], %99 {strides = array<i32>} : memref<1x4x224xf32, #tpu.memory_space<vmem>>, vector<1x4x224xf32>,
    return
  }
  func.func @transform_0(%arg0: i32) -> (i32, i32, i32) {
    %c0_i32 = arith.constant 0 : i32
    %c0_i32_0 = arith.constant 0 : i32
    %c0_i32_1 = arith.constant 0 : i32
    return %arg0, %c0_i32, %c0_i32_0 : i32, i32, i32
  }
  func.func @transform_1(%arg0: i32) -> (i32, i32, i32) {
    %c0_i32 = arith.constant 0 : i32
    %c0_i32_0 = arith.constant 0 : i32
    %c0_i32_1 = arith.constant 0 : i32
    %c0_i32_2 = arith.constant 0 : i32
    return %c0_i32, %c0_i32_0, %c0_i32_1 : i32, i32, i32
  }
  func.func @transform_2(%arg0: i32) -> (i32, i32, i32) {
    %c0_i32 = arith.constant 0 : i32
    %c0_i32_0 = arith.constant 0 : i32
    %c0_i32_1 = arith.constant 0 : i32
    %c0_i32_2 = arith.constant 0 : i32
    return %c0_i32, %c0_i32_0, %c0_i32_1 : i32, i32, i32
  }
  func.func @transform_3(%arg0: i32) -> (i32, i32) {
    %c0_i32 = arith.constant 0 : i32
    %c0_i32_0 = arith.constant 0 : i32
    %c0_i32_1 = arith.constant 0 : i32
    return %c0_i32, %c0_i32_0 : i32, i32
  }
  func.func @transform_4(%arg0: i32) -> (i32, i32) {
    %c0_i32 = arith.constant 0 : i32
    %c0_i32_0 = arith.constant 0 : i32
    %c0_i32_1 = arith.constant 0 : i32
    return %c0_i32, %c0_i32_0 : i32, i32
  }
  func.func @transform_5(%arg0: i32) -> (i32, i32, i32) {
    %c0_i32 = arith.constant 0 : i32
    %c0_i32_0 = arith.constant 0 : i32
    %c0_i32_1 = arith.constant 0 : i32
    return %arg0, %c0_i32, %c0_i32_0 : i32, i32, i32
  }
}

</mosaic_0001>

<llo_original>
// kernel: gated_conv2d.1
$region0: #{gated_conv2d.1}
  #allocation0 [shape = 'u32[]', space=smem, size = 0x4, offset = 0x4, fixed_abs, tag = 'smem constant byte address 0x4 - core index']
  #allocation1 [shape = 'u32[144,128]{1,0:T(1,128)}', space=vmem, size = 0x12000, scoped, tag = 'internal scratch']
  %s0 = inlined_call_operand.vmem [shape: f32[2,4,258], index: 0, kind: input, shape index: {}]
  %s1 = inlined_call_operand.vmem [shape: f32[9,4,4], index: 1, kind: input, shape index: {}]
  %s2 = inlined_call_operand.vmem [shape: f32[9,4,4], index: 2, kind: input, shape index: {}]
  %s3 = inlined_call_operand.vmem [shape: f32[4,1], index: 3, kind: input, shape index: {}]
  %s4 = inlined_call_operand.vmem [shape: f32[4,1], index: 4, kind: input, shape index: {}]
  %s5 = inlined_call_operand.vmem [shape: f32[2,4,224], index: 5, kind: output, shape index: {}]
  %s6 = sld [smem:[#allocation0]]
  $region53: #{gated_conv2d.1} parent=0
    _
  %s8 = ssub.s32 1, %s6
  %s9 = scalar_select 0, %s8, %s6
  loop: start=0, step=1, limit=4
  $region2: #{gated_conv2d.1} parent=0 // loop_pre_header
    _
  $region3: #{gated_conv2d.1} parent=0 // loop_header
    %s11 = sphi 0, %s15
    %p12 = scmp.ge.s32.totalorder %s11, 4
    %s21 = sphi 0, %s23
    %s24 = sphi 0, %s21
    %s25 = sphi 0, %s24
    %s41 = sphi 0, %s25
    %s45 = sphi 0, %s45
    %s47 = sphi 0, %s45
    %s48 = sphi 0, %s47
    %s62 = sphi 0, %s48
    %s66 = sphi 0, %s66
    %s68 = sphi 0, %s66
    %s69 = sphi 0, %s68
    %s83 = sphi 0, %s69
    %s87 = sphi 0, %s87
    %s89 = sphi 0, %s87
    %s90 = sphi 0, %s89
    %s104 = sphi 0, %s90
    %s108 = sphi 0, %s108
    %s110 = sphi 0, %s108
    %s111 = sphi 0, %s110
    %s125 = sphi 0, %s111
    %s131 = sphi 0, %s133
    %s134 = sphi 0, %s131
    %s135 = sphi 0, %s134
    %s151 = sphi 0, %s135
  $region4: #{gated_conv2d.1} parent=0 // loop_header_branch
    %14 = sbr.rel (%p12) target = $region8
  $region5: #{gated_conv2d.1} parent=0 // loop_body
    %s16 = ssub.s32 %s11, 1
    %s17 = ssub.s32 %s11, 2
    %s18 = sadd.s32 %s11, 1
    %s19 = ssub.s32 %s11, %s18
    %p20 = scmp.eq.s32.totalorder %s19, 0
    %s22 = sadd.s32 %s21, 1
    %s23 = scalar_select %p20, %s21, %s22
    %p26 = pneg %p20
    %p27 = scmp.eq.s32.totalorder %s11, 1
    %p28 = por %p26, %p27
    %p29 = scmp.ne.s32.totalorder %s21, %s24
    %p30 = scmp.eq.s32.totalorder %s11, 0
    %p31 = por %p29, %p30
    %p32 = scmp.ne.s32.totalorder %s21, %s24
    %p33 = scmp.eq.s32.totalorder %s16, 1
    %p34 = por %p32, %p33
    %p35 = scmp.ne.s32.totalorder %s24, %s25
    %p36 = scmp.eq.s32.totalorder %s16, 0
    %p37 = por %p35, %p36
    %p38 = scmp.ne.s32.totalorder %s24, %s25
    %p39 = scmp.eq.s32.totalorder %s17, 1
    %p40 = por %p38, %p39
    %p42 = scmp.ne.s32.totalorder %s25, %s41
    %p43 = scmp.eq.s32.totalorder %s17, 0
    %p44 = por %p42, %p43
    %s46 = sadd.s32 %s45, 1
    %p49 = scmp.eq.s32.totalorder %s11, 1
    %p50 = scmp.ne.s32.totalorder %s45, %s47
    %p51 = scmp.eq.s32.totalorder %s11, 0
    %p52 = por %p50, %p51
    %p53 = scmp.ne.s32.totalorder %s45, %s47
    %p54 = scmp.eq.s32.totalorder %s16, 1
    %p55 = por %p53, %p54
    %p56 = scmp.ne.s32.totalorder %s47, %s48
    %p57 = scmp.eq.s32.totalorder %s16, 0
    %p58 = por %p56, %p57
    %p59 = scmp.ne.s32.totalorder %s47, %s48
    %p60 = scmp.eq.s32.totalorder %s17, 1
    %p61 = por %p59, %p60
    %p63 = scmp.ne.s32.totalorder %s48, %s62
    %p64 = scmp.eq.s32.totalorder %s17, 0
    %p65 = por %p63, %p64
    %s67 = sadd.s32 %s66, 1
    %p70 = scmp.eq.s32.totalorder %s11, 1
    %p71 = scmp.ne.s32.totalorder %s66, %s68
    %p72 = scmp.eq.s32.totalorder %s11, 0
    %p73 = por %p71, %p72
    %p74 = scmp.ne.s32.totalorder %s66, %s68
    %p75 = scmp.eq.s32.totalorder %s16, 1
    %p76 = por %p74, %p75
    %p77 = scmp.ne.s32.totalorder %s68, %s69
    %p78 = scmp.eq.s32.totalorder %s16, 0
    %p79 = por %p77, %p78
    %p80 = scmp.ne.s32.totalorder %s68, %s69
    %p81 = scmp.eq.s32.totalorder %s17, 1
    %p82 = por %p80, %p81
    %p84 = scmp.ne.s32.totalorder %s69, %s83
    %p85 = scmp.eq.s32.totalorder %s17, 0
    %p86 = por %p84, %p85
    %s88 = sadd.s32 %s87, 1
    %p91 = scmp.eq.s32.totalorder %s11, 1
    %p92 = scmp.ne.s32.totalorder %s87, %s89
    %p93 = scmp.eq.s32.totalorder %s11, 0
    %p94 = por %p92, %p93
    %p95 = scmp.ne.s32.totalorder %s87, %s89
    %p96 = scmp.eq.s32.totalorder %s16, 1
    %p97 = por %p95, %p96
    %p98 = scmp.ne.s32.totalorder %s89, %s90
    %p99 = scmp.eq.s32.totalorder %s16, 0
    %p100 = por %p98, %p99
    %p101 = scmp.ne.s32.totalorder %s89, %s90
    %p102 = scmp.eq.s32.totalorder %s17, 1
    %p103 = por %p101, %p102
    %p105 = scmp.ne.s32.totalorder %s90, %s104
    %p106 = scmp.eq.s32.totalorder %s17, 0
    %p107 = por %p105, %p106
    %s109 = sadd.s32 %s108, 1
    %p112 = scmp.eq.s32.totalorder %s11, 1
    %p113 = scmp.ne.s32.totalorder %s108, %s110
    %p114 = scmp.eq.s32.totalorder %s11, 0
    %p115 = por %p113, %p114
    %p116 = scmp.ne.s32.totalorder %s108, %s110
    %p117 = scmp.eq.s32.totalorder %s16, 1
    %p118 = por %p116, %p117
    %p119 = scmp.ne.s32.totalorder %s110, %s111
    %p120 = scmp.eq.s32.totalorder %s16, 0
    %p121 = por %p119, %p120
    %p122 = scmp.ne.s32.totalorder %s110, %s111
    %p123 = scmp.eq.s32.totalorder %s17, 1
    %p124 = por %p122, %p123
    %p126 = scmp.ne.s32.totalorder %s111, %s125
    %p127 = scmp.eq.s32.totalorder %s17, 0
    %p128 = por %p126, %p127
    %s129 = ssub.s32 %s11, %s18
    %p130 = scmp.eq.s32.totalorder %s129, 0
    %s132 = sadd.s32 %s131, 1
    %s133 = scalar_select %p130, %s131, %s132
    %p136 = pneg %p130
    %p137 = scmp.eq.s32.totalorder %s11, 1
    %p138 = por %p136, %p137
    %p139 = scmp.ne.s32.totalorder %s131, %s134
    %p140 = scmp.eq.s32.totalorder %s11, 0
    %p141 = por %p139, %p140
    %p142 = scmp.ne.s32.totalorder %s131, %s134
    %p143 = scmp.eq.s32.totalorder %s16, 1
    %p144 = por %p142, %p143
    %p145 = scmp.ne.s32.totalorder %s134, %s135
    %p146 = scmp.eq.s32.totalorder %s16, 0
    %p147 = por %p145, %p146
    %p148 = scmp.ne.s32.totalorder %s134, %s135
    %p149 = scmp.eq.s32.totalorder %s17, 1
    %p150 = por %p148, %p149
    %p152 = scmp.ne.s32.totalorder %s135, %s151
    %p153 = scmp.eq.s32.totalorder %s17, 0
    %p154 = por %p152, %p153
    %p155 = scmp.le.s32.totalorder 1, %s11
    %p156 = scmp.lt.s32.totalorder %s11, 3
    %p157 = pnand %p155, %p156
    %p158 = pneg %p157
    // Predicated region
    $region9: #{gated_conv2d.1} parent=5 // pred_check
      _
    $region10: #{gated_conv2d.1} parent=5 // pred_check_branch
      %160 = sbr.rel (%p157) target = $region12
    $region11: #{gated_conv2d.1} parent=5 // pred_region
      %s161 = ssub.s32 %s11, 1
      // Predicated region
      $region13: #{gated_conv2d.1} parent=11 // pred_check
        %p162 = pneg %p58
      $region14: #{gated_conv2d.1} parent=11 // pred_check_branch
        %164 = sbr.rel (%p162) target = $region16
      $region15: #{gated_conv2d.1} parent=11 // pred_region
        _
      $region16: #{gated_conv2d.1} parent=11 // pred_fallthru
        _
      // Predicated region
      $region17: #{gated_conv2d.1} parent=11 // pred_check
        %p165 = pneg %p79
      $region18: #{gated_conv2d.1} parent=11 // pred_check_branch
        %167 = sbr.rel (%p165) target = $region20
      $region19: #{gated_conv2d.1} parent=11 // pred_region
        _
      $region20: #{gated_conv2d.1} parent=11 // pred_fallthru
        _
      // Predicated region
      $region21: #{gated_conv2d.1} parent=11 // pred_check
        %p168 = pneg %p100
      $region22: #{gated_conv2d.1} parent=11 // pred_check_branch
        %170 = sbr.rel (%p168) target = $region24
      $region23: #{gated_conv2d.1} parent=11 // pred_region
        _
      $region24: #{gated_conv2d.1} parent=11 // pred_fallthru
        _
      // Predicated region
      $region25: #{gated_conv2d.1} parent=11 // pred_check
        %p171 = pneg %p121
      $region26: #{gated_conv2d.1} parent=11 // pred_check_branch
        %173 = sbr.rel (%p171) target = $region28
      $region27: #{gated_conv2d.1} parent=11 // pred_region
        _
      $region28: #{gated_conv2d.1} parent=11 // pred_fallthru
        _
    $region12: #{gated_conv2d.1} parent=5 // pred_fallthru
      _
    %p174 = scmp.lt.s32.totalorder %s11, 2
    // Predicated region
    $region29: #{gated_conv2d.1} parent=5 // pred_check
      %p175 = pneg %p174
    $region30: #{gated_conv2d.1} parent=5 // pred_check_branch
      %177 = sbr.rel (%p175) target = $region32
    $region31: #{gated_conv2d.1} parent=5 // pred_region
      // Predicated region
      $region33: #{gated_conv2d.1} parent=31 // pred_check
        %p178 = pneg %p31
      $region34: #{gated_conv2d.1} parent=31 // pred_check_branch
        %180 = sbr.rel (%p178) target = $region36
      $region35: #{gated_conv2d.1} parent=31 // pred_region
        %p181 = scmp.lt.s32.totalorder %s11, 1
        %s182 = scalar_select %p181, %s11, 1
        %s183 = smul.addr %s182, 3
        %s184 = smul.addr %s183, 4
        %s185 = scalar_lea.vmem %s0, %s184
      $region36: #{gated_conv2d.1} parent=31 // pred_fallthru
        _
    $region32: #{gated_conv2d.1} parent=5 // pred_fallthru
      _
    %p186 = scmp.le.s32.totalorder 1, %s11
    %p187 = scmp.lt.s32.totalorder %s11, 3
    %p188 = pnand %p186, %p187
    %p189 = pneg %p188
    // Predicated region
    $region37: #{gated_conv2d.1} parent=5 // pred_check
      _
    $region38: #{gated_conv2d.1} parent=5 // pred_check_branch
      %191 = sbr.rel (%p188) target = $region40
    $region39: #{gated_conv2d.1} parent=5 // pred_region
      %s192 = ssub.s32 %s11, 1
      %p193 = scmp.lt.s32.totalorder %s16, 1
      %s194 = scalar_select %p193, %s16, 1
      %s195 = smul.addr %s194, 3
      %s196 = smul.addr %s195, 4
      %s197 = scalar_lea.vmem %s0, %s196
      %p198 = pneg %p37
      %p199 = pneg %p34
      %p200 = pneg %p58
      %p201 = pneg %p55
      %p202 = pneg %p79
      %p203 = pneg %p76
      %p204 = pneg %p100
      %p205 = pneg %p97
      %p206 = pneg %p121
      %p207 = pneg %p118
      %p208 = pneg %p147
      %p209 = pneg %p144
      %p210 = scmp.lt.s32.totalorder %s16, 1
      %s211 = scalar_select %p210, %s16, 1
      %s212 = smul.addr %s211, 2
      %s213 = smul.addr %s212, 4
      %s214 = scalar_lea.vmem %s5, %s213
      %p215 = scmp.lt.s32.totalorder %s16, 1
      %s216 = scalar_select %p215, %s16, 1
      %s217 = smul.addr %s216, 3
      %s218 = smul.addr %s217, 4
      %s219 = scalar_lea.vmem %s0, %s218
      %p220 = scmp.lt.s32.totalorder %s16, 1
      %s221 = scalar_select %p220, %s16, 1
      %s222 = smul.addr %s221, 2
      %s223 = smul.addr %s222, 4
      %s224 = scalar_lea.vmem %s5, %s223
      %v225 = vld [vmem:[%s219] sm:$0xff]
      %v226 = vld [vmem:[%s219 + $0x8] sm:$0xf]
      %v227 = vld [vmem:[%s1] sm:$0xf]
      %v228 = vld [vmem:[%s2] sm:$0xf]
      %s229 = scalar_lea.vmem %s1, 4
      %v230 = vld [vmem:[%s229] sm:$0xf]
      %v232 = vcombine.high %v225, %v225
      %233 = vrot.lane.b32.xlu0 %v225, 127
      %v234 = vpop.permute.xlu0 %233
      %235 = vrot.lane.b32.xlu0 %v232, 127
      %v236 = vpop.permute.xlu0 %235
      %vm237 = vcmask 1039360
      %v238 = vsel %vm237, %v234, %v236
      %vm239 = vcmask 31744
      %v241 = vsel %vm239, %v230, 0
      %vm243 = vcmask 1043456
      %v244 = vsel %vm243, %v238, 0
      %v246 = vsel %vm243, %v236, 0
      %248 = vmatprep.subr.mxu0 0.0
      %249 = vmatpush1.msra.mxu0 0.0
      %250 = vmatprep.subr.mxu0 0.0
      %251 = vmatpush1.msra.mxu0 0.0
      %252 = vmatprep.subr.mxu0 0.0
      %253 = vmatpush1.msra.mxu0 0.0
      %254 = vmatprep.subr.mxu0 0.0
      %255 = vmatpush1.msra.mxu0 0.0
      %256 = vmatprep.subr.mxu0 0.0
      %257 = vmatpush1.msra.mxu0 0.0
      %258 = vmatprep.subr.mxu0 0.0
      %259 = vmatpush1.msra.mxu0 0.0
      %260 = vmatprep.subr.mxu0 0.0
      %261 = vmatpush1.msra.mxu0 0.0
      %262 = vmatprep.subr.mxu0 0.0
      %263 = vmatpush1.msra.mxu0 0.0
      %264 = vmatprep.subr.mxu0 0.0
      %265 = vmatpush1.msra.mxu0 0.0
      %266 = vmatprep.subr.mxu0 0.0
      %267 = vmatpush1.msra.mxu0 0.0
      %268 = vmatprep.subr.mxu0 0.0
      %269 = vmatpush1.msra.mxu0 0.0
      %270 = vmatprep.subr.mxu0 0.0
      %271 = vmatpush1.msra.mxu0 0.0
      %272 = vmatprep.subr.mxu0 0.0
      %273 = vmatpush1.msra.mxu0 0.0
      %274 = vmatprep.subr.mxu0 0.0
      %275 = vmatpush1.msra.mxu0 0.0
      %276 = vmatprep.subr.mxu0 0.0
      %277 = vmatpush1.msra.mxu0 0.0
      %278 = vmatprep.subr.mxu0 %v246
      %279 = vmatpush1.msra.mxu0 %v244
      %280 = vmatprep.subr.mxu0 0.0
      %281 = vmatpush2.msra.mxu0 0.0
      %282 = vmatprep.subr.mxu0 0.0
      %283 = vmatpush2.msra.mxu0 0.0
      %284 = vmatprep.subr.mxu0 0.0
      %285 = vmatpush2.msra.mxu0 0.0
      %286 = vmatprep.subr.mxu0 0.0
      %287 = vmatpush2.msra.mxu0 0.0
      %288 = vmatprep.subr.mxu0 0.0
      %289 = vmatpush2.msra.mxu0 0.0
      %290 = vmatprep.subr.mxu0 0.0
      %291 = vmatpush2.msra.mxu0 0.0
      %292 = vmatprep.subr.mxu0 0.0
      %293 = vmatpush2.msra.mxu0 0.0
      %294 = vmatprep.subr.mxu0 0.0
      %295 = vmatpush2.msra.mxu0 0.0
      %296 = vmatprep.subr.mxu0 0.0
      %297 = vmatpush2.msra.mxu0 0.0
      %298 = vmatprep.subr.mxu0 0.0
      %299 = vmatpush2.msra.mxu0 0.0
      %300 = vmatprep.subr.mxu0 0.0
      %301 = vmatpush2.msra.mxu0 0.0
      %302 = vmatprep.subr.mxu0 0.0
      %303 = vmatpush2.msra.mxu0 0.0
      %304 = vmatprep.subr.mxu0 0.0
      %305 = vmatpush2.msra.mxu0 0.0
      %306 = vmatprep.subr.mxu0 0.0
      %307 = vmatpush2.msra.mxu0 0.0
      %308 = vmatprep.subr.mxu0 0.0
      %309 = vmatpush2.msra.mxu0 0.0
      %310 = vmatprep.subr.mxu0 0.0
      %311 = vmatpush2.msra.mxu0 0.0
      %312 = vmatprep.mubr.f32.mxu0 0.0
      %313 = vmatmul.mubr.f32.gmra.mxu0 %v241
      %v314 = vpop.f32.mrf.mxu0
      %v315 = vadd.f32 0.0, %v314
      %v316 = vpop.f32.mrf.mxu0
      %v317 = vadd.f32 0.0, %v316
      %318 = vdwg.mxu0
      %v320 = vsel %vm239, %v227, 0
      %v322 = vsel %vm243, %v225, 0
      %v324 = vsel %vm243, %v232, 0
      %326 = vmatprep.subr.mxu0 0.0
      %327 = vmatpush1.msra.mxu0 0.0
      %328 = vmatprep.subr.mxu0 0.0
      %329 = vmatpush1.msra.mxu0 0.0
      %330 = vmatprep.subr.mxu0 0.0
      %331 = vmatpush1.msra.mxu0 0.0
      %332 = vmatprep.subr.mxu0 0.0
      %333 = vmatpush1.msra.mxu0 0.0
      %334 = vmatprep.subr.mxu0 0.0
      %335 = vmatpush1.msra.mxu0 0.0
      %336 = vmatprep.subr.mxu0 0.0
      %337 = vmatpush1.msra.mxu0 0.0
      %338 = vmatprep.subr.mxu0 0.0
      %339 = vmatpush1.msra.mxu0 0.0
      %340 = vmatprep.subr.mxu0 0.0
      %341 = vmatpush1.msra.mxu0 0.0
      %342 = vmatprep.subr.mxu0 0.0
      %343 = vmatpush1.msra.mxu0 0.0
      %344 = vmatprep.subr.mxu0 0.0
      %345 = vmatpush1.msra.mxu0 0.0
      %346 = vmatprep.subr.mxu0 0.0
      %347 = vmatpush1.msra.mxu0 0.0
      %348 = vmatprep.subr.mxu0 0.0
      %349 = vmatpush1.msra.mxu0 0.0
      %350 = vmatprep.subr.mxu0 0.0
      %351 = vmatpush1.msra.mxu0 0.0
      %352 = vmatprep.subr.mxu0 0.0
      %353 = vmatpush1.msra.mxu0 0.0
      %354 = vmatprep.subr.mxu0 0.0
      %355 = vmatpush1.msra.mxu0 0.0
      %356 = vmatprep.subr.mxu0 %v324
      %357 = vmatpush1.msra.mxu0 %v322
      %358 = vmatprep.subr.mxu0 0.0
      %359 = vmatpush2.msra.mxu0 0.0
      %360 = vmatprep.subr.mxu0 0.0
      %361 = vmatpush2.msra.mxu0 0.0
      %362 = vmatprep.subr.mxu0 0.0
      %363 = vmatpush2.msra.mxu0 0.0
      %364 = vmatprep.subr.mxu0 0.0
      %365 = vmatpush2.msra.mxu0 0.0
      %366 = vmatprep.subr.mxu0 0.0
      %367 = vmatpush2.msra.mxu0 0.0
      %368 = vmatprep.subr.mxu0 0.0
      %369 = vmatpush2.msra.mxu0 0.0
      %370 = vmatprep.subr.mxu0 0.0
      %371 = vmatpush2.msra.mxu0 0.0
      %372 = vmatprep.subr.mxu0 0.0
      %373 = vmatpush2.msra.mxu0 0.0
      %374 = vmatprep.subr.mxu0 0.0
      %375 = vmatpush2.msra.mxu0 0.0
      %376 = vmatprep.subr.mxu0 0.0
      %377 = vmatpush2.msra.mxu0 0.0
      %378 = vmatprep.subr.mxu0 0.0
      %379 = vmatpush2.msra.mxu0 0.0
      %380 = vmatprep.subr.mxu0 0.0
      %381 = vmatpush2.msra.mxu0 0.0
      %382 = vmatprep.subr.mxu0 0.0
      %383 = vmatpush2.msra.mxu0 0.0
      %384 = vmatprep.subr.mxu0 0.0
      %385 = vmatpush2.msra.mxu0 0.0
      %386 = vmatprep.subr.mxu0 0.0
      %387 = vmatpush2.msra.mxu0 0.0
      %388 = vmatprep.subr.mxu0 0.0
      %389 = vmatpush2.msra.mxu0 0.0
      %390 = vmatprep.mubr.f32.mxu0 0.0
      %391 = vmatmul.mubr.f32.gmra.mxu0 %v320
      %v392 = vpop.f32.mrf.mxu0
      %v393 = vadd.f32 %v315, %v392
      %v394 = vpop.f32.mrf.mxu0
      %v395 = vadd.f32 %v317, %v394
      %396 = vdwg.mxu0
      %s397 = scalar_lea.vmem %s2, 4
      %v398 = vld [vmem:[%s397] sm:$0xf]
      %v400 = vsel %vm239, %v398, 0
      %402 = vmatprep.subr.mxu0 0.0
      %403 = vmatpush1.msra.mxu0 0.0
      %404 = vmatprep.subr.mxu0 0.0
      %405 = vmatpush1.msra.mxu0 0.0
      %406 = vmatprep.subr.mxu0 0.0
      %407 = vmatpush1.msra.mxu0 0.0
      %408 = vmatprep.subr.mxu0 0.0
      %409 = vmatpush1.msra.mxu0 0.0
      %410 = vmatprep.subr.mxu0 0.0
      %411 = vmatpush1.msra.mxu0 0.0
      %412 = vmatprep.subr.mxu0 0.0
      %413 = vmatpush1.msra.mxu0 0.0
      %414 = vmatprep.subr.mxu0 0.0
      %415 = vmatpush1.msra.mxu0 0.0
      %416 = vmatprep.subr.mxu0 0.0
      %417 = vmatpush1.msra.mxu0 0.0
      %418 = vmatprep.subr.mxu0 0.0
      %419 = vmatpush1.msra.mxu0 0.0
      %420 = vmatprep.subr.mxu0 0.0
      %421 = vmatpush1.msra.mxu0 0.0
      %422 = vmatprep.subr.mxu0 0.0
      %423 = vmatpush1.msra.mxu0 0.0
      %424 = vmatprep.subr.mxu0 0.0
      %425 = vmatpush1.msra.mxu0 0.0
      %426 = vmatprep.subr.mxu0 0.0
      %427 = vmatpush1.msra.mxu0 0.0
      %428 = vmatprep.subr.mxu0 0.0
      %429 = vmatpush1.msra.mxu0 0.0
      %430 = vmatprep.subr.mxu0 0.0
      %431 = vmatpush1.msra.mxu0 0.0
      %432 = vmatprep.subr.mxu0 %v246
      %433 = vmatpush1.msra.mxu0 %v244
      %434 = vmatprep.subr.mxu0 0.0
      %435 = vmatpush2.msra.mxu0 0.0
      %436 = vmatprep.subr.mxu0 0.0
      %437 = vmatpush2.msra.mxu0 0.0
      %438 = vmatprep.subr.mxu0 0.0
      %439 = vmatpush2.msra.mxu0 0.0
      %440 = vmatprep.subr.mxu0 0.0
      %441 = vmatpush2.msra.mxu0 0.0
      %442 = vmatprep.subr.mxu0 0.0
      %443 = vmatpush2.msra.mxu0 0.0
      %444 = vmatprep.subr.mxu0 0.0
      %445 = vmatpush2.msra.mxu0 0.0
      %446 = vmatprep.subr.mxu0 0.0
      %447 = vmatpush2.msra.mxu0 0.0
      %448 = vmatprep.subr.mxu0 0.0
      %449 = vmatpush2.msra.mxu0 0.0
      %450 = vmatprep.subr.mxu0 0.0
      %451 = vmatpush2.msra.mxu0 0.0
      %452 = vmatprep.subr.mxu0 0.0
      %453 = vmatpush2.msra.mxu0 0.0
      %454 = vmatprep.subr.mxu0 0.0
      %455 = vmatpush2.msra.mxu0 0.0
      %456 = vmatprep.subr.mxu0 0.0
      %457 = vmatpush2.msra.mxu0 0.0
      %458 = vmatprep.subr.mxu0 0.0
      %459 = vmatpush2.msra.mxu0 0.0
      %460 = vmatprep.subr.mxu0 0.0
      %461 = vmatpush2.msra.mxu0 0.0
      %462 = vmatprep.subr.mxu0 0.0
      %463 = vmatpush2.msra.mxu0 0.0
      %464 = vmatprep.subr.mxu0 0.0
      %465 = vmatpush2.msra.mxu0 0.0
      %466 = vmatprep.mubr.f32.mxu0 0.0
      %467 = vmatmul.mubr.f32.gmra.mxu0 %v400
      %v468 = vpop.f32.mrf.mxu0
      %v469 = vadd.f32 0.0, %v468
      %v470 = vpop.f32.mrf.mxu0
      %v471 = vadd.f32 0.0, %v470
      %472 = vdwg.mxu0
      %v474 = vsel %vm239, %v228, 0
      %476 = vmatprep.subr.mxu0 0.0
      %477 = vmatpush1.msra.mxu0 0.0
      %478 = vmatprep.subr.mxu0 0.0
      %479 = vmatpush1.msra.mxu0 0.0
      %480 = vmatprep.subr.mxu0 0.0
      %481 = vmatpush1.msra.mxu0 0.0
      %482 = vmatprep.subr.mxu0 0.0
      %483 = vmatpush1.msra.mxu0 0.0
      %484 = vmatprep.subr.mxu0 0.0
      %485 = vmatpush1.msra.mxu0 0.0
      %486 = vmatprep.subr.mxu0 0.0
      %487 = vmatpush1.msra.mxu0 0.0
      %488 = vmatprep.subr.mxu0 0.0
      %489 = vmatpush1.msra.mxu0 0.0
      %490 = vmatprep.subr.mxu0 0.0
      %491 = vmatpush1.msra.mxu0 0.0
      %492 = vmatprep.subr.mxu0 0.0
      %493 = vmatpush1.msra.mxu0 0.0
      %494 = vmatprep.subr.mxu0 0.0
      %495 = vmatpush1.msra.mxu0 0.0
      %496 = vmatprep.subr.mxu0 0.0
      %497 = vmatpush1.msra.mxu0 0.0
      %498 = vmatprep.subr.mxu0 0.0
      %499 = vmatpush1.msra.mxu0 0.0
      %500 = vmatprep.subr.mxu0 0.0
      %501 = vmatpush1.msra.mxu0 0.0
      %502 = vmatprep.subr.mxu0 0.0
      %503 = vmatpush1.msra.mxu0 0.0
      %504 = vmatprep.subr.mxu0 0.0
      %505 = vmatpush1.msra.mxu0 0.0
      %506 = vmatprep.subr.mxu0 %v324
      %507 = vmatpush1.msra.mxu0 %v322
      %508 = vmatprep.subr.mxu0 0.0
      %509 = vmatpush2.msra.mxu0 0.0
      %510 = vmatprep.subr.mxu0 0.0
      %511 = vmatpush2.msra.mxu0 0.0
      %512 = vmatprep.subr.mxu0 0.0
      %513 = vmatpush2.msra.mxu0 0.0
      %514 = vmatprep.subr.mxu0 0.0
      %515 = vmatpush2.msra.mxu0 0.0
      %516 = vmatprep.subr.mxu0 0.0
      %517 = vmatpush2.msra.mxu0 0.0
      %518 = vmatprep.subr.mxu0 0.0
      %519 = vmatpush2.msra.mxu0 0.0
      %520 = vmatprep.subr.mxu0 0.0
      %521 = vmatpush2.msra.mxu0 0.0
      %522 = vmatprep.subr.mxu0 0.0
      %523 = vmatpush2.msra.mxu0 0.0
      %524 = vmatprep.subr.mxu0 0.0
      %525 = vmatpush2.msra.mxu0 0.0
      %526 = vmatprep.subr.mxu0 0.0
      %527 = vmatpush2.msra.mxu0 0.0
      %528 = vmatprep.subr.mxu0 0.0
      %529 = vmatpush2.msra.mxu0 0.0
      %530 = vmatprep.subr.mxu0 0.0
      %531 = vmatpush2.msra.mxu0 0.0
      %532 = vmatprep.subr.mxu0 0.0
      %533 = vmatpush2.msra.mxu0 0.0
      %534 = vmatprep.subr.mxu0 0.0
      %535 = vmatpush2.msra.mxu0 0.0
      %536 = vmatprep.subr.mxu0 0.0
      %537 = vmatpush2.msra.mxu0 0.0
      %538 = vmatprep.subr.mxu0 0.0
      %539 = vmatpush2.msra.mxu0 0.0
      %540 = vmatprep.mubr.f32.mxu0 0.0
      %541 = vmatmul.mubr.f32.gmra.mxu0 %v474
      %v542 = vpop.f32.mrf.mxu0
      %v543 = vadd.f32 %v469, %v542
      %v544 = vpop.f32.mrf.mxu0
      %v545 = vadd.f32 %v471, %v544
      %546 = vdwg.mxu0
      %s547 = scalar_lea.vmem %s1, 8
      %v548 = vld [vmem:[%s547] sm:$0xf]
      %549 = vrot.lane.b32.xlu0 %v225, 126
      %v550 = vpop.permute.xlu0 %549
      %551 = vrot.lane.b32.xlu0 %v232, 126
      %v552 = vpop.permute.xlu0 %551
      %vm553 = vcmask 1031168
      %v554 = vsel %vm553, %v550, %v552
      %v556 = vsel %vm239, %v548, 0
      %v558 = vsel %vm243, %v554, 0
      %v560 = vsel %vm243, %v552, 0
      %562 = vmatprep.subr.mxu0 0.0
      %563 = vmatpush1.msra.mxu0 0.0
      %564 = vmatprep.subr.mxu0 0.0
      %565 = vmatpush1.msra.mxu0 0.0
      %566 = vmatprep.subr.mxu0 0.0
      %567 = vmatpush1.msra.mxu0 0.0
      %568 = vmatprep.subr.mxu0 0.0
      %569 = vmatpush1.msra.mxu0 0.0
      %570 = vmatprep.subr.mxu0 0.0
      %571 = vmatpush1.msra.mxu0 0.0
      %572 = vmatprep.subr.mxu0 0.0
      %573 = vmatpush1.msra.mxu0 0.0
      %574 = vmatprep.subr.mxu0 0.0
      %575 = vmatpush1.msra.mxu0 0.0
      %576 = vmatprep.subr.mxu0 0.0
      %577 = vmatpush1.msra.mxu0 0.0
      %578 = vmatprep.subr.mxu0 0.0
      %579 = vmatpush1.msra.mxu0 0.0
      %580 = vmatprep.subr.mxu0 0.0
      %581 = vmatpush1.msra.mxu0 0.0
      %582 = vmatprep.subr.mxu0 0.0
      %583 = vmatpush1.msra.mxu0 0.0
      %584 = vmatprep.subr.mxu0 0.0
      %585 = vmatpush1.msra.mxu0 0.0
      %586 = vmatprep.subr.mxu0 0.0
      %587 = vmatpush1.msra.mxu0 0.0
      %588 = vmatprep.subr.mxu0 0.0
      %589 = vmatpush1.msra.mxu0 0.0
      %590 = vmatprep.subr.mxu0 0.0
      %591 = vmatpush1.msra.mxu0 0.0
      %592 = vmatprep.subr.mxu0 %v560
      %593 = vmatpush1.msra.mxu0 %v558
      %594 = vmatprep.subr.mxu0 0.0
      %595 = vmatpush2.msra.mxu0 0.0
      %596 = vmatprep.subr.mxu0 0.0
      %597 = vmatpush2.msra.mxu0 0.0
      %598 = vmatprep.subr.mxu0 0.0
      %599 = vmatpush2.msra.mxu0 0.0
      %600 = vmatprep.subr.mxu0 0.0
      %601 = vmatpush2.msra.mxu0 0.0
      %602 = vmatprep.subr.mxu0 0.0
      %603 = vmatpush2.msra.mxu0 0.0
      %604 = vmatprep.subr.mxu0 0.0
      %605 = vmatpush2.msra.mxu0 0.0
      %606 = vmatprep.subr.mxu0 0.0
      %607 = vmatpush2.msra.mxu0 0.0
      %608 = vmatprep.subr.mxu0 0.0
      %609 = vmatpush2.msra.mxu0 0.0
      %610 = vmatprep.subr.mxu0 0.0
      %611 = vmatpush2.msra.mxu0 0.0
      %612 = vmatprep.subr.mxu0 0.0
      %613 = vmatpush2.msra.mxu0 0.0
      %614 = vmatprep.subr.mxu0 0.0
      %615 = vmatpush2.msra.mxu0 0.0
      %616 = vmatprep.subr.mxu0 0.0
      %617 = vmatpush2.msra.mxu0 0.0
      %618 = vmatprep.subr.mxu0 0.0
      %619 = vmatpush2.msra.mxu0 0.0
      %620 = vmatprep.subr.mxu0 0.0
      %621 = vmatpush2.msra.mxu0 0.0
      %622 = vmatprep.subr.mxu0 0.0
      %623 = vmatpush2.msra.mxu0 0.0
      %624 = vmatprep.subr.mxu0 0.0
      %625 = vmatpush2.msra.mxu0 0.0
      %626 = vmatprep.mubr.f32.mxu0 0.0
      %627 = vmatmul.mubr.f32.gmra.mxu0 %v556
      %v628 = vpop.f32.mrf.mxu0
      %v629 = vadd.f32 0.0, %v628
      %v630 = vpop.f32.mrf.mxu0
      %v631 = vadd.f32 0.0, %v630
      %632 = vdwg.mxu0
      %v633 = vadd.f32 %v393, %v629
      %v634 = vadd.f32 %v395, %v631
      %s635 = scalar_lea.vmem %s2, 8
      %v636 = vld [vmem:[%s635] sm:$0xf]
      %v638 = vsel %vm239, %v636, 0
      %640 = vmatprep.subr.mxu0 0.0
      %641 = vmatpush1.msra.mxu0 0.0
      %642 = vmatprep.subr.mxu0 0.0
      %643 = vmatpush1.msra.mxu0 0.0
      %644 = vmatprep.subr.mxu0 0.0
      %645 = vmatpush1.msra.mxu0 0.0
      %646 = vmatprep.subr.mxu0 0.0
      %647 = vmatpush1.msra.mxu0 0.0
      %648 = vmatprep.subr.mxu0 0.0
      %649 = vmatpush1.msra.mxu0 0.0
      %650 = vmatprep.subr.mxu0 0.0
      %651 = vmatpush1.msra.mxu0 0.0
      %652 = vmatprep.subr.mxu0 0.0
      %653 = vmatpush1.msra.mxu0 0.0
      %654 = vmatprep.subr.mxu0 0.0
      %655 = vmatpush1.msra.mxu0 0.0
      %656 = vmatprep.subr.mxu0 0.0
      %657 = vmatpush1.msra.mxu0 0.0
      %658 = vmatprep.subr.mxu0 0.0
      %659 = vmatpush1.msra.mxu0 0.0
      %660 = vmatprep.subr.mxu0 0.0
      %661 = vmatpush1.msra.mxu0 0.0
      %662 = vmatprep.subr.mxu0 0.0
      %663 = vmatpush1.msra.mxu0 0.0
      %664 = vmatprep.subr.mxu0 0.0
      %665 = vmatpush1.msra.mxu0 0.0
      %666 = vmatprep.subr.mxu0 0.0
      %667 = vmatpush1.msra.mxu0 0.0
      %668 = vmatprep.subr.mxu0 0.0
      %669 = vmatpush1.msra.mxu0 0.0
      %670 = vmatprep.subr.mxu0 %v560
      %671 = vmatpush1.msra.mxu0 %v558
      %672 = vmatprep.subr.mxu0 0.0
      %673 = vmatpush2.msra.mxu0 0.0
      %674 = vmatprep.subr.mxu0 0.0
      %675 = vmatpush2.msra.mxu0 0.0
      %676 = vmatprep.subr.mxu0 0.0
      %677 = vmatpush2.msra.mxu0 0.0
      %678 = vmatprep.subr.mxu0 0.0
      %679 = vmatpush2.msra.mxu0 0.0
      %680 = vmatprep.subr.mxu0 0.0
      %681 = vmatpush2.msra.mxu0 0.0
      %682 = vmatprep.subr.mxu0 0.0
      %683 = vmatpush2.msra.mxu0 0.0
      %684 = vmatprep.subr.mxu0 0.0
      %685 = vmatpush2.msra.mxu0 0.0
      %686 = vmatprep.subr.mxu0 0.0
      %687 = vmatpush2.msra.mxu0 0.0
      %688 = vmatprep.subr.mxu0 0.0
      %689 = vmatpush2.msra.mxu0 0.0
      %690 = vmatprep.subr.mxu0 0.0
      %691 = vmatpush2.msra.mxu0 0.0
      %692 = vmatprep.subr.mxu0 0.0
      %693 = vmatpush2.msra.mxu0 0.0
      %694 = vmatprep.subr.mxu0 0.0
      %695 = vmatpush2.msra.mxu0 0.0
      %696 = vmatprep.subr.mxu0 0.0
      %697 = vmatpush2.msra.mxu0 0.0
      %698 = vmatprep.subr.mxu0 0.0
      %699 = vmatpush2.msra.mxu0 0.0
      %700 = vmatprep.subr.mxu0 0.0
      %701 = vmatpush2.msra.mxu0 0.0
      %702 = vmatprep.subr.mxu0 0.0
      %703 = vmatpush2.msra.mxu0 0.0
      %704 = vmatprep.mubr.f32.mxu0 0.0
      %705 = vmatmul.mubr.f32.gmra.mxu0 %v638
      %v706 = vpop.f32.mrf.mxu0
      %v707 = vadd.f32 0.0, %v706
      %v708 = vpop.f32.mrf.mxu0
      %v709 = vadd.f32 0.0, %v708
      %710 = vdwg.mxu0
      %v711 = vadd.f32 %v543, %v707
      %v712 = vadd.f32 %v545, %v709
      %s713 = scalar_lea.vmem %s1, 12
      %v714 = vld [vmem:[%s713] sm:$0xf]
      %715 = vrot.lane.b32.xlu0 %v225, 112
      %v716 = vpop.permute.xlu0 %715
      %717 = vrot.lane.b32.xlu0 %v232, 112
      %v718 = vpop.permute.xlu0 %717
      %vm719 = vcmask 916480
      %v720 = vsel %vm719, %v716, %v718
      %v722 = vsel %vm239, %v714, 0
      %v724 = vsel %vm243, %v720, 0
      %v726 = vsel %vm243, %v718, 0
      %728 = vmatprep.subr.mxu0 0.0
      %729 = vmatpush1.msra.mxu0 0.0
      %730 = vmatprep.subr.mxu0 0.0
      %731 = vmatpush1.msra.mxu0 0.0
      %732 = vmatprep.subr.mxu0 0.0
      %733 = vmatpush1.msra.mxu0 0.0
      %734 = vmatprep.subr.mxu0 0.0
      %735 = vmatpush1.msra.mxu0 0.0
      %736 = vmatprep.subr.mxu0 0.0
      %737 = vmatpush1.msra.mxu0 0.0
      %738 = vmatprep.subr.mxu0 0.0
      %739 = vmatpush1.msra.mxu0 0.0
      %740 = vmatprep.subr.mxu0 0.0
      %741 = vmatpush1.msra.mxu0 0.0
      %742 = vmatprep.subr.mxu0 0.0
      %743 = vmatpush1.msra.mxu0 0.0
      %744 = vmatprep.subr.mxu0 0.0
      %745 = vmatpush1.msra.mxu0 0.0
      %746 = vmatprep.subr.mxu0 0.0
      %747 = vmatpush1.msra.mxu0 0.0
      %748 = vmatprep.subr.mxu0 0.0
      %749 = vmatpush1.msra.mxu0 0.0
      %750 = vmatprep.subr.mxu0 0.0
      %751 = vmatpush1.msra.mxu0 0.0
      %752 = vmatprep.subr.mxu0 0.0
      %753 = vmatpush1.msra.mxu0 0.0
      %754 = vmatprep.subr.mxu0 0.0
      %755 = vmatpush1.msra.mxu0 0.0
      %756 = vmatprep.subr.mxu0 0.0
      %757 = vmatpush1.msra.mxu0 0.0
      %758 = vmatprep.subr.mxu0 %v726
      %759 = vmatpush1.msra.mxu0 %v724
      %760 = vmatprep.subr.mxu0 0.0
      %761 = vmatpush2.msra.mxu0 0.0
      %762 = vmatprep.subr.mxu0 0.0
      %763 = vmatpush2.msra.mxu0 0.0
      %764 = vmatprep.subr.mxu0 0.0
      %765 = vmatpush2.msra.mxu0 0.0
      %766 = vmatprep.subr.mxu0 0.0
      %767 = vmatpush2.msra.mxu0 0.0
      %768 = vmatprep.subr.mxu0 0.0
      %769 = vmatpush2.msra.mxu0 0.0
      %770 = vmatprep.subr.mxu0 0.0
      %771 = vmatpush2.msra.mxu0 0.0
      %772 = vmatprep.subr.mxu0 0.0
      %773 = vmatpush2.msra.mxu0 0.0
      %774 = vmatprep.subr.mxu0 0.0
      %775 = vmatpush2.msra.mxu0 0.0
      %776 = vmatprep.subr.mxu0 0.0
      %777 = vmatpush2.msra.mxu0 0.0
      %778 = vmatprep.subr.mxu0 0.0
      %779 = vmatpush2.msra.mxu0 0.0
      %780 = vmatprep.subr.mxu0 0.0
      %781 = vmatpush2.msra.mxu0 0.0
      %782 = vmatprep.subr.mxu0 0.0
      %783 = vmatpush2.msra.mxu0 0.0
      %784 = vmatprep.subr.mxu0 0.0
      %785 = vmatpush2.msra.mxu0 0.0
      %786 = vmatprep.subr.mxu0 0.0
      %787 = vmatpush2.msra.mxu0 0.0
      %788 = vmatprep.subr.mxu0 0.0
      %789 = vmatpush2.msra.mxu0 0.0
      %790 = vmatprep.subr.mxu0 0.0
      %791 = vmatpush2.msra.mxu0 0.0
      %792 = vmatprep.mubr.f32.mxu0 0.0
      %793 = vmatmul.mubr.f32.gmra.mxu0 %v722
      %v794 = vpop.f32.mrf.mxu0
      %v795 = vadd.f32 0.0, %v794
      %v796 = vpop.f32.mrf.mxu0
      %v797 = vadd.f32 0.0, %v796
      %798 = vdwg.mxu0
      %v799 = vadd.f32 %v633, %v795
      %v800 = vadd.f32 %v634, %v797
      %s801 = scalar_lea.vmem %s2, 12
      %v802 = vld [vmem:[%s801] sm:$0xf]
      %v804 = vsel %vm239, %v802, 0
      %806 = vmatprep.subr.mxu0 0.0
      %807 = vmatpush1.msra.mxu0 0.0
      %808 = vmatprep.subr.mxu0 0.0
      %809 = vmatpush1.msra.mxu0 0.0
      %810 = vmatprep.subr.mxu0 0.0
      %811 = vmatpush1.msra.mxu0 0.0
      %812 = vmatprep.subr.mxu0 0.0
      %813 = vmatpush1.msra.mxu0 0.0
      %814 = vmatprep.subr.mxu0 0.0
      %815 = vmatpush1.msra.mxu0 0.0
      %816 = vmatprep.subr.mxu0 0.0
      %817 = vmatpush1.msra.mxu0 0.0
      %818 = vmatprep.subr.mxu0 0.0
      %819 = vmatpush1.msra.mxu0 0.0
      %820 = vmatprep.subr.mxu0 0.0
      %821 = vmatpush1.msra.mxu0 0.0
      %822 = vmatprep.subr.mxu0 0.0
      %823 = vmatpush1.msra.mxu0 0.0
      %824 = vmatprep.subr.mxu0 0.0
      %825 = vmatpush1.msra.mxu0 0.0
      %826 = vmatprep.subr.mxu0 0.0
      %827 = vmatpush1.msra.mxu0 0.0
      %828 = vmatprep.subr.mxu0 0.0
      %829 = vmatpush1.msra.mxu0 0.0
      %830 = vmatprep.subr.mxu0 0.0
      %831 = vmatpush1.msra.mxu0 0.0
      %832 = vmatprep.subr.mxu0 0.0
      %833 = vmatpush1.msra.mxu0 0.0
      %834 = vmatprep.subr.mxu0 0.0
      %835 = vmatpush1.msra.mxu0 0.0
      %836 = vmatprep.subr.mxu0 %v726
      %837 = vmatpush1.msra.mxu0 %v724
      %838 = vmatprep.subr.mxu0 0.0
      %839 = vmatpush2.msra.mxu0 0.0
      %840 = vmatprep.subr.mxu0 0.0
      %841 = vmatpush2.msra.mxu0 0.0
      %842 = vmatprep.subr.mxu0 0.0
      %843 = vmatpush2.msra.mxu0 0.0
      %844 = vmatprep.subr.mxu0 0.0
      %845 = vmatpush2.msra.mxu0 0.0
      %846 = vmatprep.subr.mxu0 0.0
      %847 = vmatpush2.msra.mxu0 0.0
      %848 = vmatprep.subr.mxu0 0.0
      %849 = vmatpush2.msra.mxu0 0.0
      %850 = vmatprep.subr.mxu0 0.0
      %851 = vmatpush2.msra.mxu0 0.0
      %852 = vmatprep.subr.mxu0 0.0
      %853 = vmatpush2.msra.mxu0 0.0
      %854 = vmatprep.subr.mxu0 0.0
      %855 = vmatpush2.msra.mxu0 0.0
      %856 = vmatprep.subr.mxu0 0.0
      %857 = vmatpush2.msra.mxu0 0.0
      %858 = vmatprep.subr.mxu0 0.0
      %859 = vmatpush2.msra.mxu0 0.0
      %860 = vmatprep.subr.mxu0 0.0
      %861 = vmatpush2.msra.mxu0 0.0
      %862 = vmatprep.subr.mxu0 0.0
      %863 = vmatpush2.msra.mxu0 0.0
      %864 = vmatprep.subr.mxu0 0.0
      %865 = vmatpush2.msra.mxu0 0.0
      %866 = vmatprep.subr.mxu0 0.0
      %867 = vmatpush2.msra.mxu0 0.0
      %868 = vmatprep.subr.mxu0 0.0
      %869 = vmatpush2.msra.mxu0 0.0
      %870 = vmatprep.mubr.f32.mxu0 0.0
      %871 = vmatmul.mubr.f32.gmra.mxu0 %v804
      %v872 = vpop.f32.mrf.mxu0
      %v873 = vadd.f32 0.0, %v872
      %v874 = vpop.f32.mrf.mxu0
      %v875 = vadd.f32 0.0, %v874
      %876 = vdwg.mxu0
      %v877 = vadd.f32 %v711, %v873
      %v878 = vadd.f32 %v712, %v875
      %s879 = scalar_lea.vmem %s1, 16
      %v880 = vld [vmem:[%s879] sm:$0xf]
      %881 = vrot.lane.b32.xlu0 %v225, 111
      %v882 = vpop.permute.xlu0 %881
      %883 = vrot.lane.b32.xlu0 %v232, 111
      %v884 = vpop.permute.xlu0 %883
      %vm885 = vcmask 908288
      %v886 = vsel %vm885, %v882, %v884
      %v888 = vsel %vm239, %v880, 0
      %v890 = vsel %vm243, %v886, 0
      %v892 = vsel %vm243, %v884, 0
      %894 = vmatprep.subr.mxu0 0.0
      %895 = vmatpush1.msra.mxu0 0.0
      %896 = vmatprep.subr.mxu0 0.0
      %897 = vmatpush1.msra.mxu0 0.0
      %898 = vmatprep.subr.mxu0 0.0
      %899 = vmatpush1.msra.mxu0 0.0
      %900 = vmatprep.subr.mxu0 0.0
      %901 = vmatpush1.msra.mxu0 0.0
      %902 = vmatprep.subr.mxu0 0.0
      %903 = vmatpush1.msra.mxu0 0.0
      %904 = vmatprep.subr.mxu0 0.0
      %905 = vmatpush1.msra.mxu0 0.0
      %906 = vmatprep.subr.mxu0 0.0
      %907 = vmatpush1.msra.mxu0 0.0
      %908 = vmatprep.subr.mxu0 0.0
      %909 = vmatpush1.msra.mxu0 0.0
      %910 = vmatprep.subr.mxu0 0.0
      %911 = vmatpush1.msra.mxu0 0.0
      %912 = vmatprep.subr.mxu0 0.0
      %913 = vmatpush1.msra.mxu0 0.0
      %914 = vmatprep.subr.mxu0 0.0
      %915 = vmatpush1.msra.mxu0 0.0
      %916 = vmatprep.subr.mxu0 0.0
      %917 = vmatpush1.msra.mxu0 0.0
      %918 = vmatprep.subr.mxu0 0.0
      %919 = vmatpush1.msra.mxu0 0.0
      %920 = vmatprep.subr.mxu0 0.0
      %921 = vmatpush1.msra.mxu0 0.0
      %922 = vmatprep.subr.mxu0 0.0
      %923 = vmatpush1.msra.mxu0 0.0
      %924 = vmatprep.subr.mxu0 %v892
      %925 = vmatpush1.msra.mxu0 %v890
      %926 = vmatprep.subr.mxu0 0.0
      %927 = vmatpush2.msra.mxu0 0.0
      %928 = vmatprep.subr.mxu0 0.0
      %929 = vmatpush2.msra.mxu0 0.0
      %930 = vmatprep.subr.mxu0 0.0
      %931 = vmatpush2.msra.mxu0 0.0
      %932 = vmatprep.subr.mxu0 0.0
      %933 = vmatpush2.msra.mxu0 0.0
      %934 = vmatprep.subr.mxu0 0.0
      %935 = vmatpush2.msra.mxu0 0.0
      %936 = vmatprep.subr.mxu0 0.0
      %937 = vmatpush2.msra.mxu0 0.0
      %938 = vmatprep.subr.mxu0 0.0
      %939 = vmatpush2.msra.mxu0 0.0
      %940 = vmatprep.subr.mxu0 0.0
      %941 = vmatpush2.msra.mxu0 0.0
      %942 = vmatprep.subr.mxu0 0.0
      %943 = vmatpush2.msra.mxu0 0.0
      %944 = vmatprep.subr.mxu0 0.0
      %945 = vmatpush2.msra.mxu0 0.0
      %946 = vmatprep.subr.mxu0 0.0
      %947 = vmatpush2.msra.mxu0 0.0
      %948 = vmatprep.subr.mxu0 0.0
      %949 = vmatpush2.msra.mxu0 0.0
      %950 = vmatprep.subr.mxu0 0.0
      %951 = vmatpush2.msra.mxu0 0.0
      %952 = vmatprep.subr.mxu0 0.0
      %953 = vmatpush2.msra.mxu0 0.0
      %954 = vmatprep.subr.mxu0 0.0
      %955 = vmatpush2.msra.mxu0 0.0
      %956 = vmatprep.subr.mxu0 0.0
      %957 = vmatpush2.msra.mxu0 0.0
      %958 = vmatprep.mubr.f32.mxu0 0.0
      %959 = vmatmul.mubr.f32.gmra.mxu0 %v888
      %v960 = vpop.f32.mrf.mxu0
      %v961 = vadd.f32 0.0, %v960
      %v962 = vpop.f32.mrf.mxu0
      %v963 = vadd.f32 0.0, %v962
      %964 = vdwg.mxu0
      %v965 = vadd.f32 %v799, %v961
      %v966 = vadd.f32 %v800, %v963
      %s967 = scalar_lea.vmem %s2, 16
      %v968 = vld [vmem:[%s967] sm:$0xf]
      %v970 = vsel %vm239, %v968, 0
      %972 = vmatprep.subr.mxu0 0.0
      %973 = vmatpush1.msra.mxu0 0.0
      %974 = vmatprep.subr.mxu0 0.0
      %975 = vmatpush1.msra.mxu0 0.0
      %976 = vmatprep.subr.mxu0 0.0
      %977 = vmatpush1.msra.mxu0 0.0
      %978 = vmatprep.subr.mxu0 0.0
      %979 = vmatpush1.msra.mxu0 0.0
      %980 = vmatprep.subr.mxu0 0.0
      %981 = vmatpush1.msra.mxu0 0.0
      %982 = vmatprep.subr.mxu0 0.0
      %983 = vmatpush1.msra.mxu0 0.0
      %984 = vmatprep.subr.mxu0 0.0
      %985 = vmatpush1.msra.mxu0 0.0
      %986 = vmatprep.subr.mxu0 0.0
      %987 = vmatpush1.msra.mxu0 0.0
      %988 = vmatprep.subr.mxu0 0.0
      %989 = vmatpush1.msra.mxu0 0.0
      %990 = vmatprep.subr.mxu0 0.0
      %991 = vmatpush1.msra.mxu0 0.0
      %992 = vmatprep.subr.mxu0 0.0
      %993 = vmatpush1.msra.mxu0 0.0
      %994 = vmatprep.subr.mxu0 0.0
      %995 = vmatpush1.msra.mxu0 0.0
      %996 = vmatprep.subr.mxu0 0.0
      %997 = vmatpush1.msra.mxu0 0.0
      %998 = vmatprep.subr.mxu0 0.0
      %999 = vmatpush1.msra.mxu0 0.0
      %1000 = vmatprep.subr.mxu0 0.0
      %1001 = vmatpush1.msra.mxu0 0.0
      %1002 = vmatprep.subr.mxu0 %v892
      %1003 = vmatpush1.msra.mxu0 %v890
      %1004 = vmatprep.subr.mxu0 0.0
      %1005 = vmatpush2.msra.mxu0 0.0
      %1006 = vmatprep.subr.mxu0 0.0
      %1007 = vmatpush2.msra.mxu0 0.0
      %1008 = vmatprep.subr.mxu0 0.0
      %1009 = vmatpush2.msra.mxu0 0.0
      %1010 = vmatprep.subr.mxu0 0.0
      %1011 = vmatpush2.msra.mxu0 0.0
      %1012 = vmatprep.subr.mxu0 0.0
      %1013 = vmatpush2.msra.mxu0 0.0
      %1014 = vmatprep.subr.mxu0 0.0
      %1015 = vmatpush2.msra.mxu0 0.0
      %1016 = vmatprep.subr.mxu0 0.0
      %1017 = vmatpush2.msra.mxu0 0.0
      %1018 = vmatprep.subr.mxu0 0.0
      %1019 = vmatpush2.msra.mxu0 0.0
      %1020 = vmatprep.subr.mxu0 0.0
      %1021 = vmatpush2.msra.mxu0 0.0
      %1022 = vmatprep.subr.mxu0 0.0
      %1023 = vmatpush2.msra.mxu0 0.0
      %1024 = vmatprep.subr.mxu0 0.0
      %1025 = vmatpush2.msra.mxu0 0.0
      %1026 = vmatprep.subr.mxu0 0.0
      %1027 = vmatpush2.msra.mxu0 0.0
      %1028 = vmatprep.subr.mxu0 0.0
      %1029 = vmatpush2.msra.mxu0 0.0
      %1030 = vmatprep.subr.mxu0 0.0
      %1031 = vmatpush2.msra.mxu0 0.0
      %1032 = vmatprep.subr.mxu0 0.0
      %1033 = vmatpush2.msra.mxu0 0.0
      %1034 = vmatprep.subr.mxu0 0.0
      %1035 = vmatpush2.msra.mxu0 0.0
      %1036 = vmatprep.mubr.f32.mxu0 0.0
      %1037 = vmatmul.mubr.f32.gmra.mxu0 %v970
      %v1038 = vpop.f32.mrf.mxu0
      %v1039 = vadd.f32 0.0, %v1038
      %v1040 = vpop.f32.mrf.mxu0
      %v1041 = vadd.f32 0.0, %v1040
      %1042 = vdwg.mxu0
      %v1043 = vadd.f32 %v877, %v1039
      %v1044 = vadd.f32 %v878, %v1041
      %s1045 = scalar_lea.vmem %s1, 20
      %v1046 = vld [vmem:[%s1045] sm:$0xf]
      %1047 = vrot.lane.b32.xlu0 %v225, 110
      %v1048 = vpop.permute.xlu0 %1047
      %1049 = vrot.lane.b32.xlu0 %v232, 110
      %v1050 = vpop.permute.xlu0 %1049
      %vm1051 = vcmask 900096
      %v1052 = vsel %vm1051, %v1048, %v1050
      %v1054 = vsel %vm239, %v1046, 0
      %v1056 = vsel %vm243, %v1052, 0
      %v1058 = vsel %vm243, %v1050, 0
      %1060 = vmatprep.subr.mxu0 0.0
      %1061 = vmatpush1.msra.mxu0 0.0
      %1062 = vmatprep.subr.mxu0 0.0
      %1063 = vmatpush1.msra.mxu0 0.0
      %1064 = vmatprep.subr.mxu0 0.0
      %1065 = vmatpush1.msra.mxu0 0.0
      %1066 = vmatprep.subr.mxu0 0.0
      %1067 = vmatpush1.msra.mxu0 0.0
      %1068 = vmatprep.subr.mxu0 0.0
      %1069 = vmatpush1.msra.mxu0 0.0
      %1070 = vmatprep.subr.mxu0 0.0
      %1071 = vmatpush1.msra.mxu0 0.0
      %1072 = vmatprep.subr.mxu0 0.0
      %1073 = vmatpush1.msra.mxu0 0.0
      %1074 = vmatprep.subr.mxu0 0.0
      %1075 = vmatpush1.msra.mxu0 0.0
      %1076 = vmatprep.subr.mxu0 0.0
      %1077 = vmatpush1.msra.mxu0 0.0
      %1078 = vmatprep.subr.mxu0 0.0
      %1079 = vmatpush1.msra.mxu0 0.0
      %1080 = vmatprep.subr.mxu0 0.0
      %1081 = vmatpush1.msra.mxu0 0.0
      %1082 = vmatprep.subr.mxu0 0.0
      %1083 = vmatpush1.msra.mxu0 0.0
      %1084 = vmatprep.subr.mxu0 0.0
      %1085 = vmatpush1.msra.mxu0 0.0
      %1086 = vmatprep.subr.mxu0 0.0
      %1087 = vmatpush1.msra.mxu0 0.0
      %1088 = vmatprep.subr.mxu0 0.0
      %1089 = vmatpush1.msra.mxu0 0.0
      %1090 = vmatprep.subr.mxu0 %v1058
      %1091 = vmatpush1.msra.mxu0 %v1056
      %1092 = vmatprep.subr.mxu0 0.0
      %1093 = vmatpush2.msra.mxu0 0.0
      %1094 = vmatprep.subr.mxu0 0.0
      %1095 = vmatpush2.msra.mxu0 0.0
      %1096 = vmatprep.subr.mxu0 0.0
      %1097 = vmatpush2.msra.mxu0 0.0
      %1098 = vmatprep.subr.mxu0 0.0
      %1099 = vmatpush2.msra.mxu0 0.0
      %1100 = vmatprep.subr.mxu0 0.0
      %1101 = vmatpush2.msra.mxu0 0.0
      %1102 = vmatprep.subr.mxu0 0.0
      %1103 = vmatpush2.msra.mxu0 0.0
      %1104 = vmatprep.subr.mxu0 0.0
      %1105 = vmatpush2.msra.mxu0 0.0
      %1106 = vmatprep.subr.mxu0 0.0
      %1107 = vmatpush2.msra.mxu0 0.0
      %1108 = vmatprep.subr.mxu0 0.0
      %1109 = vmatpush2.msra.mxu0 0.0
      %1110 = vmatprep.subr.mxu0 0.0
      %1111 = vmatpush2.msra.mxu0 0.0
      %1112 = vmatprep.subr.mxu0 0.0
      %1113 = vmatpush2.msra.mxu0 0.0
      %1114 = vmatprep.subr.mxu0 0.0
      %1115 = vmatpush2.msra.mxu0 0.0
      %1116 = vmatprep.subr.mxu0 0.0
      %1117 = vmatpush2.msra.mxu0 0.0
      %1118 = vmatprep.subr.mxu0 0.0
      %1119 = vmatpush2.msra.mxu0 0.0
      %1120 = vmatprep.subr.mxu0 0.0
      %1121 = vmatpush2.msra.mxu0 0.0
      %1122 = vmatprep.subr.mxu0 0.0
      %1123 = vmatpush2.msra.mxu0 0.0
      %1124 = vmatprep.mubr.f32.mxu0 0.0
      %1125 = vmatmul.mubr.f32.gmra.mxu0 %v1054
      %v1126 = vpop.f32.mrf.mxu0
      %v1127 = vadd.f32 0.0, %v1126
      %v1128 = vpop.f32.mrf.mxu0
      %v1129 = vadd.f32 0.0, %v1128
      %1130 = vdwg.mxu0
      %v1131 = vadd.f32 %v965, %v1127
      %v1132 = vadd.f32 %v966, %v1129
      %s1133 = scalar_lea.vmem %s2, 20
      %v1134 = vld [vmem:[%s1133] sm:$0xf]
      %v1136 = vsel %vm239, %v1134, 0
      %1138 = vmatprep.subr.mxu0 0.0
      %1139 = vmatpush1.msra.mxu0 0.0
      %1140 = vmatprep.subr.mxu0 0.0
      %1141 = vmatpush1.msra.mxu0 0.0
      %1142 = vmatprep.subr.mxu0 0.0
      %1143 = vmatpush1.msra.mxu0 0.0
      %1144 = vmatprep.subr.mxu0 0.0
      %1145 = vmatpush1.msra.mxu0 0.0
      %1146 = vmatprep.subr.mxu0 0.0
      %1147 = vmatpush1.msra.mxu0 0.0
      %1148 = vmatprep.subr.mxu0 0.0
      %1149 = vmatpush1.msra.mxu0 0.0
      %1150 = vmatprep.subr.mxu0 0.0
      %1151 = vmatpush1.msra.mxu0 0.0
      %1152 = vmatprep.subr.mxu0 0.0
      %1153 = vmatpush1.msra.mxu0 0.0
      %1154 = vmatprep.subr.mxu0 0.0
      %1155 = vmatpush1.msra.mxu0 0.0
      %1156 = vmatprep.subr.mxu0 0.0
      %1157 = vmatpush1.msra.mxu0 0.0
      %1158 = vmatprep.subr.mxu0 0.0
      %1159 = vmatpush1.msra.mxu0 0.0
      %1160 = vmatprep.subr.mxu0 0.0
      %1161 = vmatpush1.msra.mxu0 0.0
      %1162 = vmatprep.subr.mxu0 0.0
      %1163 = vmatpush1.msra.mxu0 0.0
      %1164 = vmatprep.subr.mxu0 0.0
      %1165 = vmatpush1.msra.mxu0 0.0
      %1166 = vmatprep.subr.mxu0 0.0
      %1167 = vmatpush1.msra.mxu0 0.0
      %1168 = vmatprep.subr.mxu0 %v1058
      %1169 = vmatpush1.msra.mxu0 %v1056
      %1170 = vmatprep.subr.mxu0 0.0
      %1171 = vmatpush2.msra.mxu0 0.0
      %1172 = vmatprep.subr.mxu0 0.0
      %1173 = vmatpush2.msra.mxu0 0.0
      %1174 = vmatprep.subr.mxu0 0.0
      %1175 = vmatpush2.msra.mxu0 0.0
      %1176 = vmatprep.subr.mxu0 0.0
      %1177 = vmatpush2.msra.mxu0 0.0
      %1178 = vmatprep.subr.mxu0 0.0
      %1179 = vmatpush2.msra.mxu0 0.0
      %1180 = vmatprep.subr.mxu0 0.0
      %1181 = vmatpush2.msra.mxu0 0.0
      %1182 = vmatprep.subr.mxu0 0.0
      %1183 = vmatpush2.msra.mxu0 0.0
      %1184 = vmatprep.subr.mxu0 0.0
      %1185 = vmatpush2.msra.mxu0 0.0
      %1186 = vmatprep.subr.mxu0 0.0
      %1187 = vmatpush2.msra.mxu0 0.0
      %1188 = vmatprep.subr.mxu0 0.0
      %1189 = vmatpush2.msra.mxu0 0.0
      %1190 = vmatprep.subr.mxu0 0.0
      %1191 = vmatpush2.msra.mxu0 0.0
      %1192 = vmatprep.subr.mxu0 0.0
      %1193 = vmatpush2.msra.mxu0 0.0
      %1194 = vmatprep.subr.mxu0 0.0
      %1195 = vmatpush2.msra.mxu0 0.0
      %1196 = vmatprep.subr.mxu0 0.0
      %1197 = vmatpush2.msra.mxu0 0.0
      %1198 = vmatprep.subr.mxu0 0.0
      %1199 = vmatpush2.msra.mxu0 0.0
      %1200 = vmatprep.subr.mxu0 0.0
      %1201 = vmatpush2.msra.mxu0 0.0
      %1202 = vmatprep.mubr.f32.mxu0 0.0
      %1203 = vmatmul.mubr.f32.gmra.mxu0 %v1136
      %v1204 = vpop.f32.mrf.mxu0
      %v1205 = vadd.f32 0.0, %v1204
      %v1206 = vpop.f32.mrf.mxu0
      %v1207 = vadd.f32 0.0, %v1206
      %1208 = vdwg.mxu0
      %v1209 = vadd.f32 %v1043, %v1205
      %v1210 = vadd.f32 %v1044, %v1207
      %s1211 = scalar_lea.vmem %s1, 24
      %v1212 = vld [vmem:[%s1211] sm:$0xf]
      %1213 = vrot.lane.b32.xlu0 %v225, 96
      %v1214 = vpop.permute.xlu0 %1213
      %1215 = vrot.lane.b32.xlu0 %v232, 96
      %v1216 = vpop.permute.xlu0 %1215
      %vm1217 = vcmask 785408
      %v1218 = vsel %vm1217, %v1214, %v1216
      %v1220 = vsel %vm239, %v1212, 0
      %v1222 = vsel %vm243, %v1218, 0
      %v1224 = vsel %vm243, %v1216, 0
      %1226 = vmatprep.subr.mxu0 0.0
      %1227 = vmatpush1.msra.mxu0 0.0
      %1228 = vmatprep.subr.mxu0 0.0
      %1229 = vmatpush1.msra.mxu0 0.0
      %1230 = vmatprep.subr.mxu0 0.0
      %1231 = vmatpush1.msra.mxu0 0.0
      %1232 = vmatprep.subr.mxu0 0.0
      %1233 = vmatpush1.msra.mxu0 0.0
      %1234 = vmatprep.subr.mxu0 0.0
      %1235 = vmatpush1.msra.mxu0 0.0
      %1236 = vmatprep.subr.mxu0 0.0
      %1237 = vmatpush1.msra.mxu0 0.0
      %1238 = vmatprep.subr.mxu0 0.0
      %1239 = vmatpush1.msra.mxu0 0.0
      %1240 = vmatprep.subr.mxu0 0.0
      %1241 = vmatpush1.msra.mxu0 0.0
      %1242 = vmatprep.subr.mxu0 0.0
      %1243 = vmatpush1.msra.mxu0 0.0
      %1244 = vmatprep.subr.mxu0 0.0
      %1245 = vmatpush1.msra.mxu0 0.0
      %1246 = vmatprep.subr.mxu0 0.0
      %1247 = vmatpush1.msra.mxu0 0.0
      %1248 = vmatprep.subr.mxu0 0.0
      %1249 = vmatpush1.msra.mxu0 0.0
      %1250 = vmatprep.subr.mxu0 0.0
      %1251 = vmatpush1.msra.mxu0 0.0
      %1252 = vmatprep.subr.mxu0 0.0
      %1253 = vmatpush1.msra.mxu0 0.0
      %1254 = vmatprep.subr.mxu0 0.0
      %1255 = vmatpush1.msra.mxu0 0.0
      %1256 = vmatprep.subr.mxu0 %v1224
      %1257 = vmatpush1.msra.mxu0 %v1222
      %1258 = vmatprep.subr.mxu0 0.0
      %1259 = vmatpush2.msra.mxu0 0.0
      %1260 = vmatprep.subr.mxu0 0.0
      %1261 = vmatpush2.msra.mxu0 0.0
      %1262 = vmatprep.subr.mxu0 0.0
      %1263 = vmatpush2.msra.mxu0 0.0
      %1264 = vmatprep.subr.mxu0 0.0
      %1265 = vmatpush2.msra.mxu0 0.0
      %1266 = vmatprep.subr.mxu0 0.0
      %1267 = vmatpush2.msra.mxu0 0.0
      %1268 = vmatprep.subr.mxu0 0.0
      %1269 = vmatpush2.msra.mxu0 0.0
      %1270 = vmatprep.subr.mxu0 0.0
      %1271 = vmatpush2.msra.mxu0 0.0
      %1272 = vmatprep.subr.mxu0 0.0
      %1273 = vmatpush2.msra.mxu0 0.0
      %1274 = vmatprep.subr.mxu0 0.0
      %1275 = vmatpush2.msra.mxu0 0.0
      %1276 = vmatprep.subr.mxu0 0.0
      %1277 = vmatpush2.msra.mxu0 0.0
      %1278 = vmatprep.subr.mxu0 0.0
      %1279 = vmatpush2.msra.mxu0 0.0
      %1280 = vmatprep.subr.mxu0 0.0
      %1281 = vmatpush2.msra.mxu0 0.0
      %1282 = vmatprep.subr.mxu0 0.0
      %1283 = vmatpush2.msra.mxu0 0.0
      %1284 = vmatprep.subr.mxu0 0.0
      %1285 = vmatpush2.msra.mxu0 0.0
      %1286 = vmatprep.subr.mxu0 0.0
      %1287 = vmatpush2.msra.mxu0 0.0
      %1288 = vmatprep.subr.mxu0 0.0
      %1289 = vmatpush2.msra.mxu0 0.0
      %1290 = vmatprep.mubr.f32.mxu0 0.0
      %1291 = vmatmul.mubr.f32.gmra.mxu0 %v1220
      %v1292 = vpop.f32.mrf.mxu0
      %v1293 = vadd.f32 0.0, %v1292
      %v1294 = vpop.f32.mrf.mxu0
      %v1295 = vadd.f32 0.0, %v1294
      %1296 = vdwg.mxu0
      %v1297 = vadd.f32 %v1131, %v1293
      %v1298 = vadd.f32 %v1132, %v1295
      %s1299 = scalar_lea.vmem %s2, 24
      %v1300 = vld [vmem:[%s1299] sm:$0xf]
      %v1302 = vsel %vm239, %v1300, 0
      %1304 = vmatprep.subr.mxu0 0.0
      %1305 = vmatpush1.msra.mxu0 0.0
      %1306 = vmatprep.subr.mxu0 0.0
      %1307 = vmatpush1.msra.mxu0 0.0
      %1308 = vmatprep.subr.mxu0 0.0
      %1309 = vmatpush1.msra.mxu0 0.0
      %1310 = vmatprep.subr.mxu0 0.0
      %1311 = vmatpush1.msra.mxu0 0.0
      %1312 = vmatprep.subr.mxu0 0.0
      %1313 = vmatpush1.msra.mxu0 0.0
      %1314 = vmatprep.subr.mxu0 0.0
      %1315 = vmatpush1.msra.mxu0 0.0
      %1316 = vmatprep.subr.mxu0 0.0
      %1317 = vmatpush1.msra.mxu0 0.0
      %1318 = vmatprep.subr.mxu0 0.0
      %1319 = vmatpush1.msra.mxu0 0.0
      %1320 = vmatprep.subr.mxu0 0.0
      %1321 = vmatpush1.msra.mxu0 0.0
      %1322 = vmatprep.subr.mxu0 0.0
      %1323 = vmatpush1.msra.mxu0 0.0
      %1324 = vmatprep.subr.mxu0 0.0
      %1325 = vmatpush1.msra.mxu0 0.0
      %1326 = vmatprep.subr.mxu0 0.0
      %1327 = vmatpush1.msra.mxu0 0.0
      %1328 = vmatprep.subr.mxu0 0.0
      %1329 = vmatpush1.msra.mxu0 0.0
      %1330 = vmatprep.subr.mxu0 0.0
      %1331 = vmatpush1.msra.mxu0 0.0
      %1332 = vmatprep.subr.mxu0 0.0
      %1333 = vmatpush1.msra.mxu0 0.0
      %1334 = vmatprep.subr.mxu0 %v1224
      %1335 = vmatpush1.msra.mxu0 %v1222
      %1336 = vmatprep.subr.mxu0 0.0
      %1337 = vmatpush2.msra.mxu0 0.0
      %1338 = vmatprep.subr.mxu0 0.0
      %1339 = vmatpush2.msra.mxu0 0.0
      %1340 = vmatprep.subr.mxu0 0.0
      %1341 = vmatpush2.msra.mxu0 0.0
      %1342 = vmatprep.subr.mxu0 0.0
      %1343 = vmatpush2.msra.mxu0 0.0
      %1344 = vmatprep.subr.mxu0 0.0
      %1345 = vmatpush2.msra.mxu0 0.0
      %1346 = vmatprep.subr.mxu0 0.0
      %1347 = vmatpush2.msra.mxu0 0.0
      %1348 = vmatprep.subr.mxu0 0.0
      %1349 = vmatpush2.msra.mxu0 0.0
      %1350 = vmatprep.subr.mxu0 0.0
      %1351 = vmatpush2.msra.mxu0 0.0
      %1352 = vmatprep.subr.mxu0 0.0
      %1353 = vmatpush2.msra.mxu0 0.0
      %1354 = vmatprep.subr.mxu0 0.0
      %1355 = vmatpush2.msra.mxu0 0.0
      %1356 = vmatprep.subr.mxu0 0.0
      %1357 = vmatpush2.msra.mxu0 0.0
      %1358 = vmatprep.subr.mxu0 0.0
      %1359 = vmatpush2.msra.mxu0 0.0
      %1360 = vmatprep.subr.mxu0 0.0
      %1361 = vmatpush2.msra.mxu0 0.0
      %1362 = vmatprep.subr.mxu0 0.0
      %1363 = vmatpush2.msra.mxu0 0.0
      %1364 = vmatprep.subr.mxu0 0.0
      %1365 = vmatpush2.msra.mxu0 0.0
      %1366 = vmatprep.subr.mxu0 0.0
      %1367 = vmatpush2.msra.mxu0 0.0
      %1368 = vmatprep.mubr.f32.mxu0 0.0
      %1369 = vmatmul.mubr.f32.gmra.mxu0 %v1302
      %v1370 = vpop.f32.mrf.mxu0
      %v1371 = vadd.f32 0.0, %v1370
      %v1372 = vpop.f32.mrf.mxu0
      %v1373 = vadd.f32 0.0, %v1372
      %1374 = vdwg.mxu0
      %v1375 = vadd.f32 %v1209, %v1371
      %v1376 = vadd.f32 %v1210, %v1373
      %s1377 = scalar_lea.vmem %s1, 28
      %v1378 = vld [vmem:[%s1377] sm:$0xf]
      %1380 = vrot.lane.b32.xlu0 %v225, 95
      %v1381 = vpop.permute.xlu0 %1380
      %1382 = vrot.lane.b32.xlu0 %v232, 95
      %v1383 = vpop.permute.xlu0 %1382
      %1384 = vrot.lane.b32.xlu0 %v226, 95
      %v1385 = vpop.permute.xlu0 %1384
      %vm1386 = vcmask 777216
      %v1387 = vsel %vm1386, %v1381, %v1383
      %v1388 = vsel %vm1386, %v1383, %v1385
      %v1390 = vsel %vm239, %v1378, 0
      %v1392 = vsel %vm243, %v1387, 0
      %v1394 = vsel %vm243, %v1388, 0
      %1396 = vmatprep.subr.mxu0 0.0
      %1397 = vmatpush1.msra.mxu0 0.0
      %1398 = vmatprep.subr.mxu0 0.0
      %1399 = vmatpush1.msra.mxu0 0.0
      %1400 = vmatprep.subr.mxu0 0.0
      %1401 = vmatpush1.msra.mxu0 0.0
      %1402 = vmatprep.subr.mxu0 0.0
      %1403 = vmatpush1.msra.mxu0 0.0
      %1404 = vmatprep.subr.mxu0 0.0
      %1405 = vmatpush1.msra.mxu0 0.0
      %1406 = vmatprep.subr.mxu0 0.0
      %1407 = vmatpush1.msra.mxu0 0.0
      %1408 = vmatprep.subr.mxu0 0.0
      %1409 = vmatpush1.msra.mxu0 0.0
      %1410 = vmatprep.subr.mxu0 0.0
      %1411 = vmatpush1.msra.mxu0 0.0
      %1412 = vmatprep.subr.mxu0 0.0
      %1413 = vmatpush1.msra.mxu0 0.0
      %1414 = vmatprep.subr.mxu0 0.0
      %1415 = vmatpush1.msra.mxu0 0.0
      %1416 = vmatprep.subr.mxu0 0.0
      %1417 = vmatpush1.msra.mxu0 0.0
      %1418 = vmatprep.subr.mxu0 0.0
      %1419 = vmatpush1.msra.mxu0 0.0
      %1420 = vmatprep.subr.mxu0 0.0
      %1421 = vmatpush1.msra.mxu0 0.0
      %1422 = vmatprep.subr.mxu0 0.0
      %1423 = vmatpush1.msra.mxu0 0.0
      %1424 = vmatprep.subr.mxu0 0.0
      %1425 = vmatpush1.msra.mxu0 0.0
      %1426 = vmatprep.subr.mxu0 %v1394
      %1427 = vmatpush1.msra.mxu0 %v1392
      %1428 = vmatprep.subr.mxu0 0.0
      %1429 = vmatpush2.msra.mxu0 0.0
      %1430 = vmatprep.subr.mxu0 0.0
      %1431 = vmatpush2.msra.mxu0 0.0
      %1432 = vmatprep.subr.mxu0 0.0
      %1433 = vmatpush2.msra.mxu0 0.0
      %1434 = vmatprep.subr.mxu0 0.0
      %1435 = vmatpush2.msra.mxu0 0.0
      %1436 = vmatprep.subr.mxu0 0.0
      %1437 = vmatpush2.msra.mxu0 0.0
      %1438 = vmatprep.subr.mxu0 0.0
      %1439 = vmatpush2.msra.mxu0 0.0
      %1440 = vmatprep.subr.mxu0 0.0
      %1441 = vmatpush2.msra.mxu0 0.0
      %1442 = vmatprep.subr.mxu0 0.0
      %1443 = vmatpush2.msra.mxu0 0.0
      %1444 = vmatprep.subr.mxu0 0.0
      %1445 = vmatpush2.msra.mxu0 0.0
      %1446 = vmatprep.subr.mxu0 0.0
      %1447 = vmatpush2.msra.mxu0 0.0
      %1448 = vmatprep.subr.mxu0 0.0
      %1449 = vmatpush2.msra.mxu0 0.0
      %1450 = vmatprep.subr.mxu0 0.0
      %1451 = vmatpush2.msra.mxu0 0.0
      %1452 = vmatprep.subr.mxu0 0.0
      %1453 = vmatpush2.msra.mxu0 0.0
      %1454 = vmatprep.subr.mxu0 0.0
      %1455 = vmatpush2.msra.mxu0 0.0
      %1456 = vmatprep.subr.mxu0 0.0
      %1457 = vmatpush2.msra.mxu0 0.0
      %1458 = vmatprep.subr.mxu0 0.0
      %1459 = vmatpush2.msra.mxu0 0.0
      %1460 = vmatprep.mubr.f32.mxu0 0.0
      %1461 = vmatmul.mubr.f32.gmra.mxu0 %v1390
      %v1462 = vpop.f32.mrf.mxu0
      %v1463 = vadd.f32 0.0, %v1462
      %v1464 = vpop.f32.mrf.mxu0
      %v1465 = vadd.f32 0.0, %v1464
      %1466 = vdwg.mxu0
      %v1467 = vadd.f32 %v1297, %v1463
      %v1468 = vadd.f32 %v1298, %v1465
      %s1469 = scalar_lea.vmem %s2, 28
      %v1470 = vld [vmem:[%s1469] sm:$0xf]
      %v1472 = vsel %vm239, %v1470, 0
      %1474 = vmatprep.subr.mxu0 0.0
      %1475 = vmatpush1.msra.mxu0 0.0
      %1476 = vmatprep.subr.mxu0 0.0
      %1477 = vmatpush1.msra.mxu0 0.0
      %1478 = vmatprep.subr.mxu0 0.0
      %1479 = vmatpush1.msra.mxu0 0.0
      %1480 = vmatprep.subr.mxu0 0.0
      %1481 = vmatpush1.msra.mxu0 0.0
      %1482 = vmatprep.subr.mxu0 0.0
      %1483 = vmatpush1.msra.mxu0 0.0
      %1484 = vmatprep.subr.mxu0 0.0
      %1485 = vmatpush1.msra.mxu0 0.0
      %1486 = vmatprep.subr.mxu0 0.0
      %1487 = vmatpush1.msra.mxu0 0.0
      %1488 = vmatprep.subr.mxu0 0.0
      %1489 = vmatpush1.msra.mxu0 0.0
      %1490 = vmatprep.subr.mxu0 0.0
      %1491 = vmatpush1.msra.mxu0 0.0
      %1492 = vmatprep.subr.mxu0 0.0
      %1493 = vmatpush1.msra.mxu0 0.0
      %1494 = vmatprep.subr.mxu0 0.0
      %1495 = vmatpush1.msra.mxu0 0.0
      %1496 = vmatprep.subr.mxu0 0.0
      %1497 = vmatpush1.msra.mxu0 0.0
      %1498 = vmatprep.subr.mxu0 0.0
      %1499 = vmatpush1.msra.mxu0 0.0
      %1500 = vmatprep.subr.mxu0 0.0
      %1501 = vmatpush1.msra.mxu0 0.0
      %1502 = vmatprep.subr.mxu0 0.0
      %1503 = vmatpush1.msra.mxu0 0.0
      %1504 = vmatprep.subr.mxu0 %v1394
      %1505 = vmatpush1.msra.mxu0 %v1392
      %1506 = vmatprep.subr.mxu0 0.0
      %1507 = vmatpush2.msra.mxu0 0.0
      %1508 = vmatprep.subr.mxu0 0.0
      %1509 = vmatpush2.msra.mxu0 0.0
      %1510 = vmatprep.subr.mxu0 0.0
      %1511 = vmatpush2.msra.mxu0 0.0
      %1512 = vmatprep.subr.mxu0 0.0
      %1513 = vmatpush2.msra.mxu0 0.0
      %1514 = vmatprep.subr.mxu0 0.0
      %1515 = vmatpush2.msra.mxu0 0.0
      %1516 = vmatprep.subr.mxu0 0.0
      %1517 = vmatpush2.msra.mxu0 0.0
      %1518 = vmatprep.subr.mxu0 0.0
      %1519 = vmatpush2.msra.mxu0 0.0
      %1520 = vmatprep.subr.mxu0 0.0
      %1521 = vmatpush2.msra.mxu0 0.0
      %1522 = vmatprep.subr.mxu0 0.0
      %1523 = vmatpush2.msra.mxu0 0.0
      %1524 = vmatprep.subr.mxu0 0.0
      %1525 = vmatpush2.msra.mxu0 0.0
      %1526 = vmatprep.subr.mxu0 0.0
      %1527 = vmatpush2.msra.mxu0 0.0
      %1528 = vmatprep.subr.mxu0 0.0
      %1529 = vmatpush2.msra.mxu0 0.0
      %1530 = vmatprep.subr.mxu0 0.0
      %1531 = vmatpush2.msra.mxu0 0.0
      %1532 = vmatprep.subr.mxu0 0.0
      %1533 = vmatpush2.msra.mxu0 0.0
      %1534 = vmatprep.subr.mxu0 0.0
      %1535 = vmatpush2.msra.mxu0 0.0
      %1536 = vmatprep.subr.mxu0 0.0
      %1537 = vmatpush2.msra.mxu0 0.0
      %1538 = vmatprep.mubr.f32.mxu0 0.0
      %1539 = vmatmul.mubr.f32.gmra.mxu0 %v1472
      %v1540 = vpop.f32.mrf.mxu0
      %v1541 = vadd.f32 0.0, %v1540
      %v1542 = vpop.f32.mrf.mxu0
      %v1543 = vadd.f32 0.0, %v1542
      %1544 = vdwg.mxu0
      %v1545 = vadd.f32 %v1375, %v1541
      %v1546 = vadd.f32 %v1376, %v1543
      %s1547 = scalar_lea.vmem %s1, 32
      %v1548 = vld [vmem:[%s1547] sm:$0xf]
      %1549 = vrot.lane.b32.xlu0 %v225, 94
      %v1550 = vpop.permute.xlu0 %1549
      %1551 = vrot.lane.b32.xlu0 %v232, 94
      %v1552 = vpop.permute.xlu0 %1551
      %1553 = vrot.lane.b32.xlu0 %v226, 94
      %v1554 = vpop.permute.xlu0 %1553
      %vm1555 = vcmask 769024
      %v1556 = vsel %vm1555, %v1550, %v1552
      %v1557 = vsel %vm1555, %v1552, %v1554
      %v1559 = vsel %vm239, %v1548, 0
      %v1561 = vsel %vm243, %v1556, 0
      %v1563 = vsel %vm243, %v1557, 0
      %1565 = vmatprep.subr.mxu0 0.0
      %1566 = vmatpush1.msra.mxu0 0.0
      %1567 = vmatprep.subr.mxu0 0.0
      %1568 = vmatpush1.msra.mxu0 0.0
      %1569 = vmatprep.subr.mxu0 0.0
      %1570 = vmatpush1.msra.mxu0 0.0
      %1571 = vmatprep.subr.mxu0 0.0
      %1572 = vmatpush1.msra.mxu0 0.0
      %1573 = vmatprep.subr.mxu0 0.0
      %1574 = vmatpush1.msra.mxu0 0.0
      %1575 = vmatprep.subr.mxu0 0.0
      %1576 = vmatpush1.msra.mxu0 0.0
      %1577 = vmatprep.subr.mxu0 0.0
      %1578 = vmatpush1.msra.mxu0 0.0
      %1579 = vmatprep.subr.mxu0 0.0
      %1580 = vmatpush1.msra.mxu0 0.0
      %1581 = vmatprep.subr.mxu0 0.0
      %1582 = vmatpush1.msra.mxu0 0.0
      %1583 = vmatprep.subr.mxu0 0.0
      %1584 = vmatpush1.msra.mxu0 0.0
      %1585 = vmatprep.subr.mxu0 0.0
      %1586 = vmatpush1.msra.mxu0 0.0
      %1587 = vmatprep.subr.mxu0 0.0
      %1588 = vmatpush1.msra.mxu0 0.0
      %1589 = vmatprep.subr.mxu0 0.0
      %1590 = vmatpush1.msra.mxu0 0.0
      %1591 = vmatprep.subr.mxu0 0.0
      %1592 = vmatpush1.msra.mxu0 0.0
      %1593 = vmatprep.subr.mxu0 0.0
      %1594 = vmatpush1.msra.mxu0 0.0
      %1595 = vmatprep.subr.mxu0 %v1563
      %1596 = vmatpush1.msra.mxu0 %v1561
      %1597 = vmatprep.subr.mxu0 0.0
      %1598 = vmatpush2.msra.mxu0 0.0
      %1599 = vmatprep.subr.mxu0 0.0
      %1600 = vmatpush2.msra.mxu0 0.0
      %1601 = vmatprep.subr.mxu0 0.0
      %1602 = vmatpush2.msra.mxu0 0.0
      %1603 = vmatprep.subr.mxu0 0.0
      %1604 = vmatpush2.msra.mxu0 0.0
      %1605 = vmatprep.subr.mxu0 0.0
      %1606 = vmatpush2.msra.mxu0 0.0
      %1607 = vmatprep.subr.mxu0 0.0
      %1608 = vmatpush2.msra.mxu0 0.0
      %1609 = vmatprep.subr.mxu0 0.0
      %1610 = vmatpush2.msra.mxu0 0.0
      %1611 = vmatprep.subr.mxu0 0.0
      %1612 = vmatpush2.msra.mxu0 0.0
      %1613 = vmatprep.subr.mxu0 0.0
      %1614 = vmatpush2.msra.mxu0 0.0
      %1615 = vmatprep.subr.mxu0 0.0
      %1616 = vmatpush2.msra.mxu0 0.0
      %1617 = vmatprep.subr.mxu0 0.0
      %1618 = vmatpush2.msra.mxu0 0.0
      %1619 = vmatprep.subr.mxu0 0.0
      %1620 = vmatpush2.msra.mxu0 0.0
      %1621 = vmatprep.subr.mxu0 0.0
      %1622 = vmatpush2.msra.mxu0 0.0
      %1623 = vmatprep.subr.mxu0 0.0
      %1624 = vmatpush2.msra.mxu0 0.0
      %1625 = vmatprep.subr.mxu0 0.0
      %1626 = vmatpush2.msra.mxu0 0.0
      %1627 = vmatprep.subr.mxu0 0.0
      %1628 = vmatpush2.msra.mxu0 0.0
      %1629 = vmatprep.mubr.f32.mxu0 0.0
      %1630 = vmatmul.mubr.f32.gmra.mxu0 %v1559
      %v1631 = vpop.f32.mrf.mxu0
      %v1632 = vadd.f32 0.0, %v1631
      %v1633 = vpop.f32.mrf.mxu0
      %v1634 = vadd.f32 0.0, %v1633
      %1635 = vdwg.mxu0
      %v1636 = vadd.f32 %v1467, %v1632
      %v1637 = vadd.f32 %v1468, %v1634
      %s1638 = scalar_lea.vmem %s2, 32
      %v1639 = vld [vmem:[%s1638] sm:$0xf]
      %v1641 = vsel %vm239, %v1639, 0
      %1643 = vmatprep.subr.mxu0 0.0
      %1644 = vmatpush1.msra.mxu0 0.0
      %1645 = vmatprep.subr.mxu0 0.0
      %1646 = vmatpush1.msra.mxu0 0.0
      %1647 = vmatprep.subr.mxu0 0.0
      %1648 = vmatpush1.msra.mxu0 0.0
      %1649 = vmatprep.subr.mxu0 0.0
      %1650 = vmatpush1.msra.mxu0 0.0
      %1651 = vmatprep.subr.mxu0 0.0
      %1652 = vmatpush1.msra.mxu0 0.0
      %1653 = vmatprep.subr.mxu0 0.0
      %1654 = vmatpush1.msra.mxu0 0.0
      %1655 = vmatprep.subr.mxu0 0.0
      %1656 = vmatpush1.msra.mxu0 0.0
      %1657 = vmatprep.subr.mxu0 0.0
      %1658 = vmatpush1.msra.mxu0 0.0
      %1659 = vmatprep.subr.mxu0 0.0
      %1660 = vmatpush1.msra.mxu0 0.0
      %1661 = vmatprep.subr.mxu0 0.0
      %1662 = vmatpush1.msra.mxu0 0.0
      %1663 = vmatprep.subr.mxu0 0.0
      %1664 = vmatpush1.msra.mxu0 0.0
      %1665 = vmatprep.subr.mxu0 0.0
      %1666 = vmatpush1.msra.mxu0 0.0
      %1667 = vmatprep.subr.mxu0 0.0
      %1668 = vmatpush1.msra.mxu0 0.0
      %1669 = vmatprep.subr.mxu0 0.0
      %1670 = vmatpush1.msra.mxu0 0.0
      %1671 = vmatprep.subr.mxu0 0.0
      %1672 = vmatpush1.msra.mxu0 0.0
      %1673 = vmatprep.subr.mxu0 %v1563
      %1674 = vmatpush1.msra.mxu0 %v1561
      %1675 = vmatprep.subr.mxu0 0.0
      %1676 = vmatpush2.msra.mxu0 0.0
      %1677 = vmatprep.subr.mxu0 0.0
      %1678 = vmatpush2.msra.mxu0 0.0
      %1679 = vmatprep.subr.mxu0 0.0
      %1680 = vmatpush2.msra.mxu0 0.0
      %1681 = vmatprep.subr.mxu0 0.0
      %1682 = vmatpush2.msra.mxu0 0.0
      %1683 = vmatprep.subr.mxu0 0.0
      %1684 = vmatpush2.msra.mxu0 0.0
      %1685 = vmatprep.subr.mxu0 0.0
      %1686 = vmatpush2.msra.mxu0 0.0
      %1687 = vmatprep.subr.mxu0 0.0
      %1688 = vmatpush2.msra.mxu0 0.0
      %1689 = vmatprep.subr.mxu0 0.0
      %1690 = vmatpush2.msra.mxu0 0.0
      %1691 = vmatprep.subr.mxu0 0.0
      %1692 = vmatpush2.msra.mxu0 0.0
      %1693 = vmatprep.subr.mxu0 0.0
      %1694 = vmatpush2.msra.mxu0 0.0
      %1695 = vmatprep.subr.mxu0 0.0
      %1696 = vmatpush2.msra.mxu0 0.0
      %1697 = vmatprep.subr.mxu0 0.0
      %1698 = vmatpush2.msra.mxu0 0.0
      %1699 = vmatprep.subr.mxu0 0.0
      %1700 = vmatpush2.msra.mxu0 0.0
      %1701 = vmatprep.subr.mxu0 0.0
      %1702 = vmatpush2.msra.mxu0 0.0
      %1703 = vmatprep.subr.mxu0 0.0
      %1704 = vmatpush2.msra.mxu0 0.0
      %1705 = vmatprep.subr.mxu0 0.0
      %1706 = vmatpush2.msra.mxu0 0.0
      %1707 = vmatprep.mubr.f32.mxu0 0.0
      %1708 = vmatmul.mubr.f32.gmra.mxu0 %v1641
      %v1709 = vpop.f32.mrf.mxu0
      %v1710 = vadd.f32 0.0, %v1709
      %v1711 = vpop.f32.mrf.mxu0
      %v1712 = vadd.f32 0.0, %v1711
      %1713 = vdwg.mxu0
      %v1714 = vadd.f32 %v1545, %v1710
      %v1715 = vadd.f32 %v1546, %v1712
      %v1716 = vld [vmem:[%s3] sm:$0xf]
      %1718 = vset.pattern.permute.xlu0 0
      %1719 = vperm.xlu0 %1718, %v1716
      %v1720 = vpop.permute.xlu0 %1719
      %v1722 = vadd.f32 %v1636, %v1720
      %v1723 = vadd.f32 %v1637, %v1720
      %v1724 = vld [vmem:[%s4] sm:$0xf]
      %1726 = vset.pattern.permute.xlu0 0
      %1727 = vperm.xlu0 %1726, %v1724
      %v1728 = vpop.permute.xlu0 %1727
      %v1730 = vadd.f32 %v1714, %v1728
      %v1731 = vadd.f32 %v1715, %v1728
      %v1732 = vxor.u32 %v1730, 2147483648
      %v1733 = vxor.u32 %v1731, 2147483648
      %v1734 = vmul.f32 %v1732, 1.442695
      %v1735 = vpow.pop %v1734
      %v1736 = vmul.f32 %v1733, 1.442695
      %v1737 = vpow.pop %v1736
      %v1738 = vadd.f32 %v1735, 1.0
      %v1739 = vadd.f32 %v1737, 1.0
      %v1740 = vrcp.pop %v1738
      %v1741 = vmul.f32 1.0, %v1740
      %v1742 = vrcp.pop %v1739
      %v1743 = vmul.f32 1.0, %v1742
      %v1744 = vmul.f32 %v1722, %v1741
      %v1745 = vmul.f32 %v1723, %v1743
      %v1748 = vcombine.low %v1744, %v1745
      %vm1750 = vcmask 785412
      %vm1751 = vmor %vm1750, %vm243
      %1752 = vst.msk [vmem:[%s224] sm:$0xff] %vm1751, %v1748
      %p1753 = scmp.lt.s32.totalorder %s16, 1
      %s1754 = scalar_select %p1753, %s16, 1
      %s1755 = smul.addr %s1754, 2
      %s1756 = smul.addr %s1755, 4
      %s1757 = scalar_lea.vmem %s5, %s1756
      // Predicated region
      $region41: #{gated_conv2d.1} parent=39 // pred_check
        %p1758 = pneg %p144
      $region42: #{gated_conv2d.1} parent=39 // pred_check_branch
        %1760 = sbr.rel (%p1758) target = $region44
      $region43: #{gated_conv2d.1} parent=39 // pred_region
        _
      $region44: #{gated_conv2d.1} parent=39 // pred_fallthru
        _
    $region40: #{gated_conv2d.1} parent=5 // pred_fallthru
      _
    %p1761 = scmp.le.s32.totalorder 2, %s11
    // Predicated region
    $region45: #{gated_conv2d.1} parent=5 // pred_check
      %p1762 = pneg %p1761
    $region46: #{gated_conv2d.1} parent=5 // pred_check_branch
      %1764 = sbr.rel (%p1762) target = $region48
    $region47: #{gated_conv2d.1} parent=5 // pred_region
      %s1765 = ssub.s32 %s11, 2
      // Predicated region
      $region49: #{gated_conv2d.1} parent=47 // pred_check
        %p1766 = pneg %p150
      $region50: #{gated_conv2d.1} parent=47 // pred_check_branch
        %1768 = sbr.rel (%p1766) target = $region52
      $region51: #{gated_conv2d.1} parent=47 // pred_region
        %p1769 = scmp.lt.s32.totalorder %s17, 1
        %s1770 = scalar_select %p1769, %s17, 1
        %s1771 = smul.addr %s1770, 2
        %s1772 = smul.addr %s1771, 4
        %s1773 = scalar_lea.vmem %s5, %s1772
      $region52: #{gated_conv2d.1} parent=47 // pred_fallthru
        _
    $region48: #{gated_conv2d.1} parent=5 // pred_fallthru
      _
  $region6: #{gated_conv2d.1} parent=0 // loop_footer
    %s15 = sadd.s32 1, %s11
  $region7: #{gated_conv2d.1} parent=0 // loop_footer_branch
    %10 = sbr.rel target = $region3
  $region8: #{gated_conv2d.1} parent=0 // loop_exit
    _

</llo_original>
